<compile_context>
chip_gen: v7x
topology: tpu7x:2x2x1
jax: 0.10.0
libtpu: 0.0.40
codegen_flags: <defaults>
</compile_context>

<pallas_src>
import jax
import jax.numpy as jnp
from jax.experimental import pallas as pl
from jax.experimental.pallas import tpu as pltpu


def _basic_loss_kernel(out_red_ref, in_blue_ref, im_ref, mr_ref, mb_ref,
                       sre_ref, sro_ref, sce_ref, sco_ref,
                       mse_ref, r_ref, psum_ref):
    f32 = jnp.float32
    im = im_ref[...].astype(f32)                 # (2*TH, W)  full-res row tile
    qr = im * mr_ref[...].astype(f32)            # im * mask_red
    qb = im * mb_ref[...].astype(f32)            # im * mask_blue

    sre = sre_ref[...]                           # (TH, 2*TH) picks even rows
    sro = sro_ref[...]                           # (TH, 2*TH) picks odd rows
    sce = sce_ref[...]                           # (W, W2)    picks even cols
    sco = sco_ref[...]                           # (W, W2)    picks odd cols

    def pool2x2(q):
        # max_pool2d(q, kernel=2, stride=2) via exact 0/1 selection matmuls
        # (exactly one nonzero per output element -> plain row/col picks).
        re = jnp.dot(sre, q, preferred_element_type=f32)    # q[even rows]
        ro = jnp.dot(sro, q, preferred_element_type=f32)    # q[odd rows]
        rm = jnp.maximum(re, ro)                            # (TH, W)
        ce = jnp.dot(rm, sce, preferred_element_type=f32)   # rm[:, even cols]
        co = jnp.dot(rm, sco, preferred_element_type=f32)   # rm[:, odd cols]
        return jnp.maximum(ce, co)                          # (TH, W2)

    red_restore = jnp.clip(pool2x2(qr), 0.0, 1.0)
    blue_restore = jnp.clip(pool2x2(qb), 0.0, 1.0)

    o = jnp.clip(out_red_ref[...].astype(f32), 0.0, 1.0)
    diff = o - in_blue_ref[...].astype(f32)
    mse = diff * diff                            # == |diff| ** 2
    big_r = (diff - red_restore + blue_restore) ** 2
    # TODO(synk): torch also computes r2 = |red_restore - blue_restore| but it
    # is never used or returned, so it is intentionally omitted.

    mse_ref[...] = mse.astype(mse_ref.dtype)
    r_ref[...] = big_r.astype(r_ref.dtype)
    psum_ref[...] = jnp.sum(mse + big_r)[None, None]   # per-block partial sum


def _pick_row_tile(h2):
    """Largest divisor of H2 (in half-res rows) that keeps blocks small and
    (8,128)/(32,128)-friendly (candidates are multiples of 16)."""
    if h2 <= 128:
        return h2
    for t in (128, 112, 96, 80, 64, 48, 32, 16, 8):
        if h2 % t == 0:
            return t
    return h2   # fall back: whole plane per step (VMEM-heavy for huge images)


def _row_selector(th, parity):
    # (th, 2*th) with S[y, 2*y + parity] = 1  ->  S @ x picks rows of that parity.
    y = jnp.arange(th, dtype=jnp.int32)[:, None]
    i = jnp.arange(2 * th, dtype=jnp.int32)[None, :]
    return (i == 2 * y + parity).astype(jnp.float32)


def _col_selector(w2, parity):
    # (2*w2, w2) with S[2*x + parity, x] = 1  ->  x @ S picks cols of that parity.
    j = jnp.arange(2 * w2, dtype=jnp.int32)[:, None]
    x = jnp.arange(w2, dtype=jnp.int32)[None, :]
    return (j == 2 * x + parity).astype(jnp.float32)


def basic_loss(out_red, in_blue, im_restore, mask_red, mask_blue):
    N, C, H, W = im_restore.shape
    assert H % 2 == 0 and W % 2 == 0
    H2, W2 = H // 2, W // 2
    B = N * C
    assert out_red.shape == (N, C, H2, W2)
    assert in_blue.shape == (N, C, H2, W2)
    assert mask_red.shape == (N, C, H, W) and mask_blue.shape == (N, C, H, W)

    th = _pick_row_tile(H2)     # half-res rows per grid step
    nh = H2 // th

    # Free (contiguous) reshapes only -- no HBM copies, no transposes.
    im = im_restore.reshape(B, H, W)
    mr = mask_red.reshape(B, H, W)
    mb = mask_blue.reshape(B, H, W)
    o = out_red.reshape(B, H2, W2)
    ib = in_blue.reshape(B, H2, W2)

    # Exact 0/1 selection matrices (tiny vs. the image data; kept resident in
    # VMEM across grid steps because their block index never changes).
    sre = _row_selector(th, 0)
    sro = _row_selector(th, 1)
    sce = _col_selector(W2, 0)
    sco = _col_selector(W2, 1)

    half_spec = pl.BlockSpec((None, th, W2), lambda b, h: (b, h, 0))
    full_spec = pl.BlockSpec((None, 2 * th, W), lambda b, h: (b, h, 0))
    rowsel_spec = pl.BlockSpec((th, 2 * th), lambda b, h: (0, 0))
    colsel_spec = pl.BlockSpec((W, W2), lambda b, h: (0, 0))
    psum_spec = pl.BlockSpec((None, None, 1, 1), lambda b, h: (b, h, 0, 0))

    # Explicit VMEM budget: double-buffered per-step blocks + resident selectors.
    isz = lambda x: jnp.dtype(x.dtype).itemsize
    block_bytes = (2 * th * W * (isz(im_restore) + isz(mask_red) + isz(mask_blue))
                   + th * W2 * (isz(out_red) + isz(in_blue) + 4 + 4) + 16)
    const_bytes = 2 * th * (2 * th) * 4 + 2 * W * W2 * 4
    est = 2 * block_bytes + 2 * const_bytes
    vmem_limit = int(min(max(2 * est, 32 * 2 ** 20), 48 * 2 ** 20))

    mse, big_r, psum = pl.pallas_call(
        _basic_loss_kernel,
        out_shape=(
            jax.ShapeDtypeStruct((B, H2, W2), jnp.float32),
            jax.ShapeDtypeStruct((B, H2, W2), jnp.float32),
            jax.ShapeDtypeStruct((B, nh, 1, 1), jnp.float32),
        ),
        grid_spec=pltpu.PrefetchScalarGridSpec(
            num_scalar_prefetch=0,
            grid=(B, nh),
            in_specs=[half_spec, half_spec, full_spec, full_spec, full_spec,
                      rowsel_spec, rowsel_spec, colsel_spec, colsel_spec],
            out_specs=(half_spec, half_spec, psum_spec),
        ),
        compiler_params=pltpu.CompilerParams(
            dimension_semantics=("parallel", "parallel"),
            vmem_limit_bytes=vmem_limit),
    )(o, ib, im, mr, mb, sre, sro, sce, sco)

    mean = jnp.sum(psum) / (B * H2 * W2)
    return mean, mse.reshape(N, C, H2, W2), big_r.reshape(N, C, H2, W2)


def _reference(out_red, in_blue, im_restore, mask_red, mask_blue):
    def pool(x):
        n, c, h, w = x.shape
        return jnp.max(x.reshape(n, c, h // 2, 2, w // 2, 2), axis=(3, 5))
    o = jnp.clip(out_red, 0.0, 1.0)
    red = jnp.clip(pool(im_restore * mask_red), 0.0, 1.0)
    blue = jnp.clip(pool(im_restore * mask_blue), 0.0, 1.0)
    mse = jnp.abs(o - in_blue) ** 2
    big_r = (o - in_blue - red + blue) ** 2
    return jnp.mean(mse + big_r), mse, big_r


if __name__ == "__main__":
    key = jax.random.PRNGKey(0)
    k1, k2, k3, k4, k5 = jax.random.split(key, 5)
    N, C, H, W = 2, 4, 16, 16

    out_red = jax.random.uniform(k1, (N, C, H // 2, W // 2), jnp.float32, -0.5, 1.5)
    in_blue = jax.random.uniform(k2, (N, C, H // 2, W // 2), jnp.float32)
    im_restore = jax.random.uniform(k3, (N, C, H, W), jnp.float32, -0.5, 1.5)
    # Masks ship as int8 (4x fewer HBM bytes than f32); the kernel casts in VMEM.
    mask_red = (jax.random.uniform(k4, (N, C, H, W)) > 0.5).astype(jnp.int8)
    mask_blue = (jax.random.uniform(k5, (N, C, H, W)) > 0.5).astype(jnp.int8)

    mean, mse, R = jax.jit(basic_loss)(out_red, in_blue, im_restore,
                                       mask_red, mask_blue)
    jax.block_until_ready((mean, mse, R))

    ref_mean, ref_mse, ref_R = _reference(out_red, in_blue, im_restore,
                                          mask_red.astype(jnp.float32),
                                          mask_blue.astype(jnp.float32))
    assert jnp.allclose(mean, ref_mean, atol=1e-5), (mean, ref_mean)
    assert jnp.allclose(mse, ref_mse, atol=1e-5)
    assert jnp.allclose(R, ref_R, atol=1e-5)
    print("KERNEL_OK")
</pallas_src>

<mosaic_0001>
module attributes {stable_mosaic.version = 11 : i64} {
  func.func @_basic_loss_kernel(%arg0: i32, %arg1: i32, %arg2: memref<1x8x8xf32, #tpu.memory_space<vmem>>, %arg3: memref<1x8x8xf32, #tpu.memory_space<vmem>>, %arg4: memref<1x16x16xf32, #tpu.memory_space<vmem>>, %arg5: memref<1x16x16xi8, #tpu.memory_space<vmem>>, %arg6: memref<1x16x16xi8, #tpu.memory_space<vmem>>, %arg7: memref<8x16xf32, #tpu.memory_space<vmem>>, %arg8: memref<8x16xf32, #tpu.memory_space<vmem>>, %arg9: memref<16x8xf32, #tpu.memory_space<vmem>>, %arg10: memref<16x8xf32, #tpu.memory_space<vmem>>, %arg11: memref<1x8x8xf32, #tpu.memory_space<vmem>>, %arg12: memref<1x8x8xf32, #tpu.memory_space<vmem>>, %arg13: memref<1x1x1x1xf32, #tpu.memory_space<vmem>>) attributes {dimension_semantics = [#tpu.dimension_semantics<parallel>, #tpu.dimension_semantics<parallel>], iteration_bounds = array<i64: 8, 1>, scalar_prefetch = 0 : i64, scratch_operands = 0 : i64, tpu.core_type = #tpu.core_type<tc>, window_params = [{transform_indices = @transform_0, window_bounds = array<i64: 1, 8, 8>}, {transform_indices = @transform_1, window_bounds = array<i64: 1, 8, 8>}, {transform_indices = @transform_2, window_bounds = array<i64: 1, 16, 16>}, {transform_indices = @transform_3, window_bounds = array<i64: 1, 16, 16>}, {transform_indices = @transform_4, window_bounds = array<i64: 1, 16, 16>}, {pipeline_mode = #tpu.pipeline_mode<synchronous>, transform_indices = @transform_5, window_bounds = array<i64: 8, 16>}, {pipeline_mode = #tpu.pipeline_mode<synchronous>, transform_indices = @transform_6, window_bounds = array<i64: 8, 16>}, {pipeline_mode = #tpu.pipeline_mode<synchronous>, transform_indices = @transform_7, window_bounds = array<i64: 16, 8>}, {pipeline_mode = #tpu.pipeline_mode<synchronous>, transform_indices = @transform_8, window_bounds = array<i64: 16, 8>}, {transform_indices = @transform_9, window_bounds = array<i64: 1, 8, 8>}, {transform_indices = @transform_10, window_bounds = array<i64: 1, 8, 8>}, {transform_indices = @transform_11, window_bounds = array<i64: 1, 1, 1, 1>}]} {
    %c0 = arith.constant 0 : index
    %c0_0 = arith.constant 0 : index
    %c0_1 = arith.constant 0 : index
    %0 = vector.load %arg4[%c0, %c0_0, %c0_1] : memref<1x16x16xf32, #tpu.memory_space<vmem>>, vector<1x16x16xf32>
    %1 = vector.shape_cast %0 : vector<1x16x16xf32> to vector<16x16xf32>
    %c0_2 = arith.constant 0 : index
    %c0_3 = arith.constant 0 : index
    %c0_4 = arith.constant 0 : index
    %2 = vector.load %arg5[%c0_2, %c0_3, %c0_4] : memref<1x16x16xi8, #tpu.memory_space<vmem>>, vector<1x16x16xi8>
    %3 = vector.shape_cast %2 : vector<1x16x16xi8> to vector<16x16xi8>
    %4 = arith.sitofp %3 : vector<16x16xi8> to vector<16x16xf32>
    %5 = arith.mulf %1, %4 : vector<16x16xf32>
    %c0_5 = arith.constant 0 : index
    %c0_6 = arith.constant 0 : index
    %c0_7 = arith.constant 0 : index
    %6 = vector.load %arg6[%c0_5, %c0_6, %c0_7] : memref<1x16x16xi8, #tpu.memory_space<vmem>>, vector<1x16x16xi8>
    %7 = vector.shape_cast %6 : vector<1x16x16xi8> to vector<16x16xi8>
    %8 = arith.sitofp %7 : vector<16x16xi8> to vector<16x16xf32>
    %9 = arith.mulf %1, %8 : vector<16x16xf32>
    %c0_8 = arith.constant 0 : index
    %c0_9 = arith.constant 0 : index
    %10 = vector.load %arg7[%c0_8, %c0_9] : memref<8x16xf32, #tpu.memory_space<vmem>>, vector<8x16xf32>
    %c0_10 = arith.constant 0 : index
    %c0_11 = arith.constant 0 : index
    %11 = vector.load %arg8[%c0_10, %c0_11] : memref<8x16xf32, #tpu.memory_space<vmem>>, vector<8x16xf32>
    %c0_12 = arith.constant 0 : index
    %c0_13 = arith.constant 0 : index
    %12 = vector.load %arg9[%c0_12, %c0_13] : memref<16x8xf32, #tpu.memory_space<vmem>>, vector<16x8xf32>
    %c0_14 = arith.constant 0 : index
    %c0_15 = arith.constant 0 : index
    %13 = vector.load %arg10[%c0_14, %c0_15] : memref<16x8xf32, #tpu.memory_space<vmem>>, vector<16x8xf32>
    %cst = arith.constant dense<0.000000e+00> : vector<8x16xf32>
    %14 = tpu.matmul %10, %5, %cst {dimension_numbers = #tpu.dot_dimension_numbers<[1], [0], [0], [1], [0, 0, 1, 1], [], []>} : vector<8x16xf32>, vector<16x16xf32>, vector<8x16xf32> -> vector<8x16xf32>
    %cst_16 = arith.constant dense<0.000000e+00> : vector<8x16xf32>
    %15 = tpu.matmul %11, %5, %cst_16 {dimension_numbers = #tpu.dot_dimension_numbers<[1], [0], [0], [1], [0, 0, 1, 1], [], []>} : vector<8x16xf32>, vector<16x16xf32>, vector<8x16xf32> -> vector<8x16xf32>
    %16 = arith.maximumf %14, %15 : vector<8x16xf32>
    %cst_17 = arith.constant dense<0.000000e+00> : vector<8x8xf32>
    %17 = tpu.matmul %16, %12, %cst_17 {dimension_numbers = #tpu.dot_dimension_numbers<[1], [0], [0], [1], [0, 0, 1, 1], [], []>} : vector<8x16xf32>, vector<16x8xf32>, vector<8x8xf32> -> vector<8x8xf32>
    %cst_18 = arith.constant dense<0.000000e+00> : vector<8x8xf32>
    %18 = tpu.matmul %16, %13, %cst_18 {dimension_numbers = #tpu.dot_dimension_numbers<[1], [0], [0], [1], [0, 0, 1, 1], [], []>} : vector<8x16xf32>, vector<16x8xf32>, vector<8x8xf32> -> vector<8x8xf32>
    %19 = arith.maximumf %17, %18 : vector<8x8xf32>
    %cst_19 = arith.constant 0.000000e+00 : f32
    %cst_20 = arith.constant 1.000000e+00 : f32
    %20 = vector.broadcast %cst_19 : f32 to vector<8x8xf32>
    %21 = arith.maximumf %20, %19 : vector<8x8xf32>
    %22 = vector.broadcast %cst_20 : f32 to vector<8x8xf32>
    %23 = arith.minimumf %22, %21 : vector<8x8xf32>
    %cst_21 = arith.constant dense<0.000000e+00> : vector<8x16xf32>
    %24 = tpu.matmul %10, %9, %cst_21 {dimension_numbers = #tpu.dot_dimension_numbers<[1], [0], [0], [1], [0, 0, 1, 1], [], []>} : vector<8x16xf32>, vector<16x16xf32>, vector<8x16xf32> -> vector<8x16xf32>
    %cst_22 = arith.constant dense<0.000000e+00> : vector<8x16xf32>
    %25 = tpu.matmul %11, %9, %cst_22 {dimension_numbers = #tpu.dot_dimension_numbers<[1], [0], [0], [1], [0, 0, 1, 1], [], []>} : vector<8x16xf32>, vector<16x16xf32>, vector<8x16xf32> -> vector<8x16xf32>
    %26 = arith.maximumf %24, %25 : vector<8x16xf32>
    %cst_23 = arith.constant dense<0.000000e+00> : vector<8x8xf32>
    %27 = tpu.matmul %26, %12, %cst_23 {dimension_numbers = #tpu.dot_dimension_numbers<[1], [0], [0], [1], [0, 0, 1, 1], [], []>} : vector<8x16xf32>, vector<16x8xf32>, vector<8x8xf32> -> vector<8x8xf32>
    %cst_24 = arith.constant dense<0.000000e+00> : vector<8x8xf32>
    %28 = tpu.matmul %26, %13, %cst_24 {dimension_numbers = #tpu.dot_dimension_numbers<[1], [0], [0], [1], [0, 0, 1, 1], [], []>} : vector<8x16xf32>, vector<16x8xf32>, vector<8x8xf32> -> vector<8x8xf32>
    %29 = arith.maximumf %27, %28 : vector<8x8xf32>
    %cst_25 = arith.constant 0.000000e+00 : f32
    %cst_26 = arith.constant 1.000000e+00 : f32
    %30 = vector.broadcast %cst_25 : f32 to vector<8x8xf32>
    %31 = arith.maximumf %30, %29 : vector<8x8xf32>
    %32 = vector.broadcast %cst_26 : f32 to vector<8x8xf32>
    %33 = arith.minimumf %32, %31 : vector<8x8xf32>
    %c0_27 = arith.constant 0 : index
    %c0_28 = arith.constant 0 : index
    %c0_29 = arith.constant 0 : index
    %34 = vector.load %arg2[%c0_27, %c0_28, %c0_29] : memref<1x8x8xf32, #tpu.memory_space<vmem>>, vector<1x8x8xf32>
    %35 = vector.shape_cast %34 : vector<1x8x8xf32> to vector<8x8xf32>
    %cst_30 = arith.constant 0.000000e+00 : f32
    %cst_31 = arith.constant 1.000000e+00 : f32
    %36 = vector.broadcast %cst_30 : f32 to vector<8x8xf32>
    %37 = arith.maximumf %36, %35 : vector<8x8xf32>
    %38 = vector.broadcast %cst_31 : f32 to vector<8x8xf32>
    %39 = arith.minimumf %38, %37 : vector<8x8xf32>
    %c0_32 = arith.constant 0 : index
    %c0_33 = arith.constant 0 : index
    %c0_34 = arith.constant 0 : index
    %40 = vector.load %arg3[%c0_32, %c0_33, %c0_34] : memref<1x8x8xf32, #tpu.memory_space<vmem>>, vector<1x8x8xf32>
    %41 = vector.shape_cast %40 : vector<1x8x8xf32> to vector<8x8xf32>
    %42 = arith.subf %39, %41 : vector<8x8xf32>
    %43 = arith.mulf %42, %42 : vector<8x8xf32>
    %44 = arith.subf %42, %23 : vector<8x8xf32>
    %45 = arith.addf %44, %33 : vector<8x8xf32>
    %46 = arith.mulf %45, %45 : vector<8x8xf32>
    %c0_35 = arith.constant 0 : index
    %c0_36 = arith.constant 0 : index
    %c0_37 = arith.constant 0 : index
    %47 = vector.load %arg11[%c0_35, %c0_36, %c0_37] : memref<1x8x8xf32, #tpu.memory_space<vmem>>, vector<1x8x8xf32>
    %48 = vector.shape_cast %47 : vector<1x8x8xf32> to vector<8x8xf32>
    %49 = vector.shape_cast %43 : vector<8x8xf32> to vector<1x8x8xf32>
    tpu.vector_store %arg11[%c0_35, %c0_36, %c0_37], %49 {strides = array<i32>} : memref<1x8x8xf32, #tpu.memory_space<vmem>>, vector<1x8x8xf32>,
    %c0_38 = arith.constant 0 : index
    %c0_39 = arith.constant 0 : index
    %c0_40 = arith.constant 0 : index
    %50 = vector.load %arg12[%c0_38, %c0_39, %c0_40] : memref<1x8x8xf32, #tpu.memory_space<vmem>>, vector<1x8x8xf32>
    %51 = vector.shape_cast %50 : vector<1x8x8xf32> to vector<8x8xf32>
    %52 = vector.shape_cast %46 : vector<8x8xf32> to vector<1x8x8xf32>
    tpu.vector_store %arg12[%c0_38, %c0_39, %c0_40], %52 {strides = array<i32>} : memref<1x8x8xf32, #tpu.memory_space<vmem>>, vector<1x8x8xf32>,
    %53 = arith.addf %43, %46 : vector<8x8xf32>
    %54 = vector.shape_cast %53 : vector<8x8xf32> to vector<1x8x8xf32>
    %cst_41 = arith.constant dense<0.000000e+00> : vector<1xf32>
    %55 = vector.multi_reduction <add>, %54, %cst_41 [1, 2] : vector<1x8x8xf32> to vector<1xf32>
    %56 = vector.shape_cast %55 : vector<1xf32> to vector<1x1x1xf32>
    %57 = vector.extract %56[0, 0, 0] : f32 from vector<1x1x1xf32>
    %58 = vector.broadcast %57 : f32 to vector<1x1xf32>
    %c0_42 = arith.constant 0 : index
    %c0_43 = arith.constant 0 : index
    %c0_44 = arith.constant 0 : index
    %c0_45 = arith.constant 0 : index
    %59 = vector.load %arg13[%c0_42, %c0_43, %c0_44, %c0_45] : memref<1x1x1x1xf32, #tpu.memory_space<vmem>>, vector<1x1x1x1xf32>
    %60 = vector.shape_cast %59 : vector<1x1x1x1xf32> to vector<1x1xf32>
    %61 = vector.shape_cast %58 : vector<1x1xf32> to vector<1x1x1x1xf32>
    tpu.vector_store %arg13[%c0_42, %c0_43, %c0_44, %c0_45], %61 {strides = array<i32>} : memref<1x1x1x1xf32, #tpu.memory_space<vmem>>, vector<1x1x1x1xf32>,
    return
  }
  func.func @transform_0(%arg0: i32, %arg1: i32) -> (i32, i32, i32) {
    %c0_i32 = arith.constant 0 : i32
    %c0_i32_0 = arith.constant 0 : i32
    return %arg0, %arg1, %c0_i32 : i32, i32, i32
  }
  func.func @transform_1(%arg0: i32, %arg1: i32) -> (i32, i32, i32) {
    %c0_i32 = arith.constant 0 : i32
    %c0_i32_0 = arith.constant 0 : i32
    return %arg0, %arg1, %c0_i32 : i32, i32, i32
  }
  func.func @transform_2(%arg0: i32, %arg1: i32) -> (i32, i32, i32) {
    %c0_i32 = arith.constant 0 : i32
    %c0_i32_0 = arith.constant 0 : i32
    return %arg0, %arg1, %c0_i32 : i32, i32, i32
  }
  func.func @transform_3(%arg0: i32, %arg1: i32) -> (i32, i32, i32) {
    %c0_i32 = arith.constant 0 : i32
    %c0_i32_0 = arith.constant 0 : i32
    return %arg0, %arg1, %c0_i32 : i32, i32, i32
  }
  func.func @transform_4(%arg0: i32, %arg1: i32) -> (i32, i32, i32) {
    %c0_i32 = arith.constant 0 : i32
    %c0_i32_0 = arith.constant 0 : i32
    return %arg0, %arg1, %c0_i32 : i32, i32, i32
  }
  func.func @transform_5(%arg0: i32, %arg1: i32) -> (i32, i32) {
    %c0_i32 = arith.constant 0 : i32
    %c0_i32_0 = arith.constant 0 : i32
    %c0_i32_1 = arith.constant 0 : i32
    return %c0_i32, %c0_i32_0 : i32, i32
  }
  func.func @transform_6(%arg0: i32, %arg1: i32) -> (i32, i32) {
    %c0_i32 = arith.constant 0 : i32
    %c0_i32_0 = arith.constant 0 : i32
    %c0_i32_1 = arith.constant 0 : i32
    return %c0_i32, %c0_i32_0 : i32, i32
  }
  func.func @transform_7(%arg0: i32, %arg1: i32) -> (i32, i32) {
    %c0_i32 = arith.constant 0 : i32
    %c0_i32_0 = arith.constant 0 : i32
    %c0_i32_1 = arith.constant 0 : i32
    return %c0_i32, %c0_i32_0 : i32, i32
  }
  func.func @transform_8(%arg0: i32, %arg1: i32) -> (i32, i32) {
    %c0_i32 = arith.constant 0 : i32
    %c0_i32_0 = arith.constant 0 : i32
    %c0_i32_1 = arith.constant 0 : i32
    return %c0_i32, %c0_i32_0 : i32, i32
  }
  func.func @transform_9(%arg0: i32, %arg1: i32) -> (i32, i32, i32) {
    %c0_i32 = arith.constant 0 : i32
    %c0_i32_0 = arith.constant 0 : i32
    return %arg0, %arg1, %c0_i32 : i32, i32, i32
  }
  func.func @transform_10(%arg0: i32, %arg1: i32) -> (i32, i32, i32) {
    %c0_i32 = arith.constant 0 : i32
    %c0_i32_0 = arith.constant 0 : i32
    return %arg0, %arg1, %c0_i32 : i32, i32, i32
  }
  func.func @transform_11(%arg0: i32, %arg1: i32) -> (i32, i32, i32, i32) {
    %c0_i32 = arith.constant 0 : i32
    %c0_i32_0 = arith.constant 0 : i32
    %c0_i32_1 = arith.constant 0 : i32
    return %arg0, %arg1, %c0_i32, %c0_i32_0 : i32, i32, i32, i32
  }
}

</mosaic_0001>

<llo_original>
// kernel: basic_loss.1
$region0: #{basic_loss.1}
  #allocation0 [shape = 'u32[]', space=smem, size = 0x4, offset = 0x4, fixed_abs, tag = 'smem constant byte address 0x4 - core index']
  #allocation1 [shape = 'u32[144,128]{1,0:T(1,128)}', space=vmem, size = 0x12000, scoped, tag = 'internal scratch']
  %s0 = inlined_call_operand.vmem [shape: f32[8,8,8], index: 0, kind: input, shape index: {}]
  %s1 = inlined_call_operand.hbm [shape: f32[8,8,8], index: 1, kind: input, shape index: {}]
  %s2 = inlined_call_operand.hbm [shape: f32[8,16,16], index: 2, kind: input, shape index: {}]
  %s3 = inlined_call_operand.vmem [shape: s8[8,16,16], index: 3, kind: input, shape index: {}]
  %s4 = inlined_call_operand.hbm [shape: s8[8,16,16], index: 4, kind: input, shape index: {}]
  %s5 = inlined_call_operand.vmem [shape: f32[8,16], index: 5, kind: input, shape index: {}]
  %s6 = inlined_call_operand.vmem [shape: f32[8,16], index: 6, kind: input, shape index: {}]
  %s7 = inlined_call_operand.vmem [shape: f32[16,8], index: 7, kind: input, shape index: {}]
  %s8 = inlined_call_operand.vmem [shape: f32[16,8], index: 8, kind: input, shape index: {}]
  %s9 = inlined_call_operand.hbm [shape: f32[8,8,8], index: 9, kind: output, shape index: {0}]
  %s10 = inlined_call_operand.hbm [shape: f32[8,8,8], index: 10, kind: output, shape index: {1}]
  %s11 = inlined_call_operand.vmem [shape: f32[8,1,1,1], index: 11, kind: output, shape index: {2}]
  %12 = xla_tuple %s9, %s10, %s11
  %s13 = sld [smem:[#allocation0]]
  $region97: #{basic_loss.1} parent=0
    _
  %s15 = ssub.s32 1, %s13
  %s16 = scalar_select 0, %s15, %s13
  $region1: #{basic_loss.1} parent=0
    #allocation2 [shape = 'u8[8192]{0}', space=vmem, size = 0x2000, scoped, tag = 'input window, operand 1']
    #allocation3 [shape = 's32[2]{0}', space=sflag, size = 0x8, scoped, tag = 'scoped memory for basic_loss.1']
    #allocation4 [shape = 's32[2]{0}', space=sflag, size = 0x8, scoped, tag = 'scoped memory for basic_loss.1']
    #allocation5 [shape = 'u8[16384]{0}', space=vmem, size = 0x4000, scoped, tag = 'input window, operand 2']
    #allocation6 [shape = 's32[2]{0}', space=sflag, size = 0x8, scoped, tag = 'scoped memory for basic_loss.1']
    #allocation7 [shape = 'u8[4096]{0}', space=vmem, size = 0x1000, scoped, tag = 'input window, operand 4']
    #allocation8 [shape = 'u8[8192]{0}', space=vmem, size = 0x2000, scoped, tag = 'output window, operand 0']
    #allocation9 [shape = 'u8[8192]{0}', space=vmem, size = 0x2000, scoped, tag = 'output window, operand 1']
    #allocation10 [shape = 's32[2]{0}', space=sflag, size = 0x8, scoped, tag = 'scoped memory for basic_loss.1']
    %17 = vsyncpa [#allocation3], 0
    %s18 = scalar_lea.sflag [#allocation3], 1
    %19 = vsyncpa %s18, 0
    %20 = vsyncpa [#allocation6], 0
    %s21 = scalar_lea.sflag [#allocation6], 1
    %22 = vsyncpa %s21, 0
    %23 = vsyncpa [#allocation4], 0
    %s24 = scalar_lea.sflag [#allocation4], 1
    %25 = vsyncpa %s24, 0
    %26 = vsyncpa [#allocation10], 0
    %s27 = scalar_lea.sflag [#allocation10], 1
    %28 = vsyncpa %s27, 0
    loop: start=0, step=1, limit=10
    $region2: #{basic_loss.1} parent=1 // loop_pre_header
      _
    $region3: #{basic_loss.1} parent=1 // loop_header
      %s30 = sphi 0, %s34
      %p31 = scmp.ge.s32.totalorder %s30, 10
      %s37 = sphi 0, %s49
      %s38 = sphi 0, %s45
      %s39 = sphi 0, %s37
      %s40 = sphi 0, %s38
      %s41 = sphi 0, %s39
      %s42 = sphi 0, %s40
      %s54 = sphi 0, %s56
      %s57 = sphi 0, %s54
      %s58 = sphi 0, %s57
      %s74 = sphi 0, %s58
      %s82 = sphi 0, %s84
      %s85 = sphi 0, %s82
      %s86 = sphi 0, %s85
      %s102 = sphi 0, %s86
      %s110 = sphi 0, %s112
      %s113 = sphi 0, %s110
      %s114 = sphi 0, %s113
      %s130 = sphi 0, %s114
      %s138 = sphi 0, %s140
      %s141 = sphi 0, %s138
      %s142 = sphi 0, %s141
      %s158 = sphi 0, %s142
      %s166 = sphi 0, %s168
      %s169 = sphi 0, %s166
      %s170 = sphi 0, %s169
      %s186 = sphi 0, %s170
      %s190 = sphi 0, %s190
      %s192 = sphi 0, %s190
      %s193 = sphi 0, %s192
      %s207 = sphi 0, %s193
      %s211 = sphi 0, %s211
      %s213 = sphi 0, %s211
      %s214 = sphi 0, %s213
      %s228 = sphi 0, %s214
      %s232 = sphi 0, %s232
      %s234 = sphi 0, %s232
      %s235 = sphi 0, %s234
      %s249 = sphi 0, %s235
      %s253 = sphi 0, %s253
      %s255 = sphi 0, %s253
      %s256 = sphi 0, %s255
      %s270 = sphi 0, %s256
      %s278 = sphi 0, %s280
      %s281 = sphi 0, %s278
      %s282 = sphi 0, %s281
      %s298 = sphi 0, %s282
      %s306 = sphi 0, %s308
      %s309 = sphi 0, %s306
      %s310 = sphi 0, %s309
      %s326 = sphi 0, %s310
      %s334 = sphi 0, %s336
      %s337 = sphi 0, %s334
      %s338 = sphi 0, %s337
      %s354 = sphi 0, %s338
    $region4: #{basic_loss.1} parent=1 // loop_header_branch
      %33 = sbr.rel (%p31) target = $region8
    $region5: #{basic_loss.1} parent=1 // loop_body
      %s35 = ssub.s32 %s30, 1
      %s36 = ssub.s32 %s30, 2
      %s43 = sadd.s32 1, %s38
      %p44 = scmp.ge.s32.totalorder %s43, 1
      %s45 = scalar_select %p44, 0, %s43
      %s46 = sadd.s32 1, %s37
      %s47 = scalar_select %p44, %s46, %s37
      %p48 = scmp.ge.s32.totalorder %s47, 8
      %s49 = scalar_select %p48, 0, %s47
      %s50 = ssub.s32 %s37, %s49
      %s51 = ssub.s32 %s38, %s45
      %s52 = sor.u32 %s50, %s51
      %p53 = scmp.eq.s32.totalorder %s52, 0
      %s55 = sadd.s32 %s54, 1
      %s56 = scalar_select %p53, %s54, %s55
      %p59 = pneg %p53
      %p60 = scmp.eq.s32.totalorder %s30, 7
      %p61 = por %p59, %p60
      %p62 = scmp.ne.s32.totalorder %s54, %s57
      %p63 = scmp.eq.s32.totalorder %s30, 0
      %p64 = por %p62, %p63
      %p65 = scmp.ne.s32.totalorder %s54, %s57
      %p66 = scmp.eq.s32.totalorder %s35, 7
      %p67 = por %p65, %p66
      %p68 = scmp.ne.s32.totalorder %s57, %s58
      %p69 = scmp.eq.s32.totalorder %s35, 0
      %p70 = por %p68, %p69
      %p71 = scmp.ne.s32.totalorder %s57, %s58
      %p72 = scmp.eq.s32.totalorder %s36, 7
      %p73 = por %p71, %p72
      %p75 = scmp.ne.s32.totalorder %s58, %s74
      %p76 = scmp.eq.s32.totalorder %s36, 0
      %p77 = por %p75, %p76
      %s78 = ssub.s32 %s37, %s49
      %s79 = ssub.s32 %s38, %s45
      %s80 = sor.u32 %s78, %s79
      %p81 = scmp.eq.s32.totalorder %s80, 0
      %s83 = sadd.s32 %s82, 1
      %s84 = scalar_select %p81, %s82, %s83
      %p87 = pneg %p81
      %p88 = scmp.eq.s32.totalorder %s30, 7
      %p89 = por %p87, %p88
      %p90 = scmp.ne.s32.totalorder %s82, %s85
      %p91 = scmp.eq.s32.totalorder %s30, 0
      %p92 = por %p90, %p91
      %p93 = scmp.ne.s32.totalorder %s82, %s85
      %p94 = scmp.eq.s32.totalorder %s35, 7
      %p95 = por %p93, %p94
      %p96 = scmp.ne.s32.totalorder %s85, %s86
      %p97 = scmp.eq.s32.totalorder %s35, 0
      %p98 = por %p96, %p97
      %p99 = scmp.ne.s32.totalorder %s85, %s86
      %p100 = scmp.eq.s32.totalorder %s36, 7
      %p101 = por %p99, %p100
      %p103 = scmp.ne.s32.totalorder %s86, %s102
      %p104 = scmp.eq.s32.totalorder %s36, 0
      %p105 = por %p103, %p104
      %s106 = ssub.s32 %s37, %s49
      %s107 = ssub.s32 %s38, %s45
      %s108 = sor.u32 %s106, %s107
      %p109 = scmp.eq.s32.totalorder %s108, 0
      %s111 = sadd.s32 %s110, 1
      %s112 = scalar_select %p109, %s110, %s111
      %p115 = pneg %p109
      %p116 = scmp.eq.s32.totalorder %s30, 7
      %p117 = por %p115, %p116
      %p118 = scmp.ne.s32.totalorder %s110, %s113
      %p119 = scmp.eq.s32.totalorder %s30, 0
      %p120 = por %p118, %p119
      %p121 = scmp.ne.s32.totalorder %s110, %s113
      %p122 = scmp.eq.s32.totalorder %s35, 7
      %p123 = por %p121, %p122
      %p124 = scmp.ne.s32.totalorder %s113, %s114
      %p125 = scmp.eq.s32.totalorder %s35, 0
      %p126 = por %p124, %p125
      %p127 = scmp.ne.s32.totalorder %s113, %s114
      %p128 = scmp.eq.s32.totalorder %s36, 7
      %p129 = por %p127, %p128
      %p131 = scmp.ne.s32.totalorder %s114, %s130
      %p132 = scmp.eq.s32.totalorder %s36, 0
      %p133 = por %p131, %p132
      %s134 = ssub.s32 %s37, %s49
      %s135 = ssub.s32 %s38, %s45
      %s136 = sor.u32 %s134, %s135
      %p137 = scmp.eq.s32.totalorder %s136, 0
      %s139 = sadd.s32 %s138, 1
      %s140 = scalar_select %p137, %s138, %s139
      %p143 = pneg %p137
      %p144 = scmp.eq.s32.totalorder %s30, 7
      %p145 = por %p143, %p144
      %p146 = scmp.ne.s32.totalorder %s138, %s141
      %p147 = scmp.eq.s32.totalorder %s30, 0
      %p148 = por %p146, %p147
      %p149 = scmp.ne.s32.totalorder %s138, %s141
      %p150 = scmp.eq.s32.totalorder %s35, 7
      %p151 = por %p149, %p150
      %p152 = scmp.ne.s32.totalorder %s141, %s142
      %p153 = scmp.eq.s32.totalorder %s35, 0
      %p154 = por %p152, %p153
      %p155 = scmp.ne.s32.totalorder %s141, %s142
      %p156 = scmp.eq.s32.totalorder %s36, 7
      %p157 = por %p155, %p156
      %p159 = scmp.ne.s32.totalorder %s142, %s158
      %p160 = scmp.eq.s32.totalorder %s36, 0
      %p161 = por %p159, %p160
      %s162 = ssub.s32 %s37, %s49
      %s163 = ssub.s32 %s38, %s45
      %s164 = sor.u32 %s162, %s163
      %p165 = scmp.eq.s32.totalorder %s164, 0
      %s167 = sadd.s32 %s166, 1
      %s168 = scalar_select %p165, %s166, %s167
      %p171 = pneg %p165
      %p172 = scmp.eq.s32.totalorder %s30, 7
      %p173 = por %p171, %p172
      %p174 = scmp.ne.s32.totalorder %s166, %s169
      %p175 = scmp.eq.s32.totalorder %s30, 0
      %p176 = por %p174, %p175
      %p177 = scmp.ne.s32.totalorder %s166, %s169
      %p178 = scmp.eq.s32.totalorder %s35, 7
      %p179 = por %p177, %p178
      %p180 = scmp.ne.s32.totalorder %s169, %s170
      %p181 = scmp.eq.s32.totalorder %s35, 0
      %p182 = por %p180, %p181
      %p183 = scmp.ne.s32.totalorder %s169, %s170
      %p184 = scmp.eq.s32.totalorder %s36, 7
      %p185 = por %p183, %p184
      %p187 = scmp.ne.s32.totalorder %s170, %s186
      %p188 = scmp.eq.s32.totalorder %s36, 0
      %p189 = por %p187, %p188
      %s191 = sadd.s32 %s190, 1
      %p194 = scmp.eq.s32.totalorder %s30, 7
      %p195 = scmp.ne.s32.totalorder %s190, %s192
      %p196 = scmp.eq.s32.totalorder %s30, 0
      %p197 = por %p195, %p196
      %p198 = scmp.ne.s32.totalorder %s190, %s192
      %p199 = scmp.eq.s32.totalorder %s35, 7
      %p200 = por %p198, %p199
      %p201 = scmp.ne.s32.totalorder %s192, %s193
      %p202 = scmp.eq.s32.totalorder %s35, 0
      %p203 = por %p201, %p202
      %p204 = scmp.ne.s32.totalorder %s192, %s193
      %p205 = scmp.eq.s32.totalorder %s36, 7
      %p206 = por %p204, %p205
      %p208 = scmp.ne.s32.totalorder %s193, %s207
      %p209 = scmp.eq.s32.totalorder %s36, 0
      %p210 = por %p208, %p209
      %s212 = sadd.s32 %s211, 1
      %p215 = scmp.eq.s32.totalorder %s30, 7
      %p216 = scmp.ne.s32.totalorder %s211, %s213
      %p217 = scmp.eq.s32.totalorder %s30, 0
      %p218 = por %p216, %p217
      %p219 = scmp.ne.s32.totalorder %s211, %s213
      %p220 = scmp.eq.s32.totalorder %s35, 7
      %p221 = por %p219, %p220
      %p222 = scmp.ne.s32.totalorder %s213, %s214
      %p223 = scmp.eq.s32.totalorder %s35, 0
      %p224 = por %p222, %p223
      %p225 = scmp.ne.s32.totalorder %s213, %s214
      %p226 = scmp.eq.s32.totalorder %s36, 7
      %p227 = por %p225, %p226
      %p229 = scmp.ne.s32.totalorder %s214, %s228
      %p230 = scmp.eq.s32.totalorder %s36, 0
      %p231 = por %p229, %p230
      %s233 = sadd.s32 %s232, 1
      %p236 = scmp.eq.s32.totalorder %s30, 7
      %p237 = scmp.ne.s32.totalorder %s232, %s234
      %p238 = scmp.eq.s32.totalorder %s30, 0
      %p239 = por %p237, %p238
      %p240 = scmp.ne.s32.totalorder %s232, %s234
      %p241 = scmp.eq.s32.totalorder %s35, 7
      %p242 = por %p240, %p241
      %p243 = scmp.ne.s32.totalorder %s234, %s235
      %p244 = scmp.eq.s32.totalorder %s35, 0
      %p245 = por %p243, %p244
      %p246 = scmp.ne.s32.totalorder %s234, %s235
      %p247 = scmp.eq.s32.totalorder %s36, 7
      %p248 = por %p246, %p247
      %p250 = scmp.ne.s32.totalorder %s235, %s249
      %p251 = scmp.eq.s32.totalorder %s36, 0
      %p252 = por %p250, %p251
      %s254 = sadd.s32 %s253, 1
      %p257 = scmp.eq.s32.totalorder %s30, 7
      %p258 = scmp.ne.s32.totalorder %s253, %s255
      %p259 = scmp.eq.s32.totalorder %s30, 0
      %p260 = por %p258, %p259
      %p261 = scmp.ne.s32.totalorder %s253, %s255
      %p262 = scmp.eq.s32.totalorder %s35, 7
      %p263 = por %p261, %p262
      %p264 = scmp.ne.s32.totalorder %s255, %s256
      %p265 = scmp.eq.s32.totalorder %s35, 0
      %p266 = por %p264, %p265
      %p267 = scmp.ne.s32.totalorder %s255, %s256
      %p268 = scmp.eq.s32.totalorder %s36, 7
      %p269 = por %p267, %p268
      %p271 = scmp.ne.s32.totalorder %s256, %s270
      %p272 = scmp.eq.s32.totalorder %s36, 0
      %p273 = por %p271, %p272
      %s274 = ssub.s32 %s37, %s49
      %s275 = ssub.s32 %s38, %s45
      %s276 = sor.u32 %s274, %s275
      %p277 = scmp.eq.s32.totalorder %s276, 0
      %s279 = sadd.s32 %s278, 1
      %s280 = scalar_select %p277, %s278, %s279
      %p283 = pneg %p277
      %p284 = scmp.eq.s32.totalorder %s30, 7
      %p285 = por %p283, %p284
      %p286 = scmp.ne.s32.totalorder %s278, %s281
      %p287 = scmp.eq.s32.totalorder %s30, 0
      %p288 = por %p286, %p287
      %p289 = scmp.ne.s32.totalorder %s278, %s281
      %p290 = scmp.eq.s32.totalorder %s35, 7
      %p291 = por %p289, %p290
      %p292 = scmp.ne.s32.totalorder %s281, %s282
      %p293 = scmp.eq.s32.totalorder %s35, 0
      %p294 = por %p292, %p293
      %p295 = scmp.ne.s32.totalorder %s281, %s282
      %p296 = scmp.eq.s32.totalorder %s36, 7
      %p297 = por %p295, %p296
      %p299 = scmp.ne.s32.totalorder %s282, %s298
      %p300 = scmp.eq.s32.totalorder %s36, 0
      %p301 = por %p299, %p300
      %s302 = ssub.s32 %s37, %s49
      %s303 = ssub.s32 %s38, %s45
      %s304 = sor.u32 %s302, %s303
      %p305 = scmp.eq.s32.totalorder %s304, 0
      %s307 = sadd.s32 %s306, 1
      %s308 = scalar_select %p305, %s306, %s307
      %p311 = pneg %p305
      %p312 = scmp.eq.s32.totalorder %s30, 7
      %p313 = por %p311, %p312
      %p314 = scmp.ne.s32.totalorder %s306, %s309
      %p315 = scmp.eq.s32.totalorder %s30, 0
      %p316 = por %p314, %p315
      %p317 = scmp.ne.s32.totalorder %s306, %s309
      %p318 = scmp.eq.s32.totalorder %s35, 7
      %p319 = por %p317, %p318
      %p320 = scmp.ne.s32.totalorder %s309, %s310
      %p321 = scmp.eq.s32.totalorder %s35, 0
      %p322 = por %p320, %p321
      %p323 = scmp.ne.s32.totalorder %s309, %s310
      %p324 = scmp.eq.s32.totalorder %s36, 7
      %p325 = por %p323, %p324
      %p327 = scmp.ne.s32.totalorder %s310, %s326
      %p328 = scmp.eq.s32.totalorder %s36, 0
      %p329 = por %p327, %p328
      %s330 = ssub.s32 %s37, %s49
      %s331 = ssub.s32 %s38, %s45
      %s332 = sor.u32 %s330, %s331
      %p333 = scmp.eq.s32.totalorder %s332, 0
      %s335 = sadd.s32 %s334, 1
      %s336 = scalar_select %p333, %s334, %s335
      %p339 = pneg %p333
      %p340 = scmp.eq.s32.totalorder %s30, 7
      %p341 = por %p339, %p340
      %p342 = scmp.ne.s32.totalorder %s334, %s337
      %p343 = scmp.eq.s32.totalorder %s30, 0
      %p344 = por %p342, %p343
      %p345 = scmp.ne.s32.totalorder %s334, %s337
      %p346 = scmp.eq.s32.totalorder %s35, 7
      %p347 = por %p345, %p346
      %p348 = scmp.ne.s32.totalorder %s337, %s338
      %p349 = scmp.eq.s32.totalorder %s35, 0
      %p350 = por %p348, %p349
      %p351 = scmp.ne.s32.totalorder %s337, %s338
      %p352 = scmp.eq.s32.totalorder %s36, 7
      %p353 = por %p351, %p352
      %p355 = scmp.ne.s32.totalorder %s338, %s354
      %p356 = scmp.eq.s32.totalorder %s36, 0
      %p357 = por %p355, %p356
      %p358 = scmp.le.s32.totalorder 1, %s30
      %p359 = scmp.lt.s32.totalorder %s30, 9
      %p360 = pnand %p358, %p359
      %p361 = pneg %p360
      // Predicated region
      $region9: #{basic_loss.1} parent=5 // pred_check
        _
      $region10: #{basic_loss.1} parent=5 // pred_check_branch
        %363 = sbr.rel (%p360) target = $region12
      $region11: #{basic_loss.1} parent=5 // pred_region
        %s364 = ssub.s32 %s30, 1
        // Predicated region
        $region13: #{basic_loss.1} parent=11 // pred_check
          %p365 = pneg %p203
        $region14: #{basic_loss.1} parent=11 // pred_check_branch
          %367 = sbr.rel (%p365) target = $region16
        $region15: #{basic_loss.1} parent=11 // pred_region
          _
        $region16: #{basic_loss.1} parent=11 // pred_fallthru
          _
        // Predicated region
        $region17: #{basic_loss.1} parent=11 // pred_check
          %p368 = pneg %p224
        $region18: #{basic_loss.1} parent=11 // pred_check_branch
          %370 = sbr.rel (%p368) target = $region20
        $region19: #{basic_loss.1} parent=11 // pred_region
          _
        $region20: #{basic_loss.1} parent=11 // pred_fallthru
          _
        // Predicated region
        $region21: #{basic_loss.1} parent=11 // pred_check
          %p371 = pneg %p245
        $region22: #{basic_loss.1} parent=11 // pred_check_branch
          %373 = sbr.rel (%p371) target = $region24
        $region23: #{basic_loss.1} parent=11 // pred_region
          _
        $region24: #{basic_loss.1} parent=11 // pred_fallthru
          _
        // Predicated region
        $region25: #{basic_loss.1} parent=11 // pred_check
          %p374 = pneg %p266
        $region26: #{basic_loss.1} parent=11 // pred_check_branch
          %376 = sbr.rel (%p374) target = $region28
        $region27: #{basic_loss.1} parent=11 // pred_region
          _
        $region28: #{basic_loss.1} parent=11 // pred_fallthru
          _
      $region12: #{basic_loss.1} parent=5 // pred_fallthru
        _
      %p377 = scmp.lt.s32.totalorder %s30, 8
      // Predicated region
      $region29: #{basic_loss.1} parent=5 // pred_check
        %p378 = pneg %p377
      $region30: #{basic_loss.1} parent=5 // pred_check_branch
        %380 = sbr.rel (%p378) target = $region32
      $region31: #{basic_loss.1} parent=5 // pred_region
        // Predicated region
        $region33: #{basic_loss.1} parent=31 // pred_check
          %p381 = pneg %p64
        $region34: #{basic_loss.1} parent=31 // pred_check_branch
          %383 = sbr.rel (%p381) target = $region36
        $region35: #{basic_loss.1} parent=31 // pred_region
          %p384 = scmp.lt.s32.totalorder %s37, 7
          %s385 = scalar_select %p384, %s37, 7
          %p386 = scmp.lt.s32.totalorder %s38, 0
          %s387 = scalar_select %p386, %s38, 0
          %s388 = sadd.s32 %s387, %s385
          %s389 = smul.addr %s388, 8
          %s390 = scalar_lea.vmem %s0, %s389
        $region36: #{basic_loss.1} parent=31 // pred_fallthru
          _
        // Predicated region
        $region37: #{basic_loss.1} parent=31 // pred_check
          %p391 = pneg %p92
        $region38: #{basic_loss.1} parent=31 // pred_check_branch
          %393 = sbr.rel (%p391) target = $region40
        $region39: #{basic_loss.1} parent=31 // pred_region
          %s394 = sand.u32 %s82, 1
          %s395 = scalar_lea.sflag [#allocation3], %s394
          %s396 = sand.u32 %s82, 1
          %s397 = smul.addr %s396, 8
          %s398 = scalar_lea.vmem [#allocation2], %s397
          %s400 = ssub.s32 128, 128
          %401 = vsyncadd %s395, %s400
          %s402 = sadd.s32 %s38, %s37
          %s403 = smul.addr %s402, 128
          %s404 = scalar_lea.hbm %s1, %s403
          %s406 = sshll.u32 %s398, 4
          %s407 = int_to_ptr.vmem [resolvable:$true] %s406
          %409 = dma.hbm_to_vmem [thread:$0]  %s404, 128, %s407, %s395
        $region40: #{basic_loss.1} parent=31 // pred_fallthru
          _
        // Predicated region
        $region41: #{basic_loss.1} parent=31 // pred_check
          %p410 = pneg %p120
        $region42: #{basic_loss.1} parent=31 // pred_check_branch
          %412 = sbr.rel (%p410) target = $region44
        $region43: #{basic_loss.1} parent=31 // pred_region
          %s413 = sand.u32 %s30, 1
          %s414 = scalar_lea.sflag [#allocation6], %s413
          %s415 = sand.u32 %s110, 1
          %s416 = smul.addr %s415, 16
          %s417 = scalar_lea.vmem [#allocation5], %s416
          %s418 = smul.u32 2, %s38
          %s420 = ssub.s32 256, 256
          %421 = vsyncadd %s414, %s420
          %s422 = smul.addr %s37, 2
          %s423 = sadd.s32 %s418, %s422
          %s424 = smul.addr %s423, 128
          %s425 = scalar_lea.hbm %s2, %s424
          %s426 = sshll.u32 %s417, 4
          %s427 = int_to_ptr.vmem [resolvable:$true] %s426
          %432 = dma.hbm_to_vmem [thread:$0]  %s425, 256, %s427, %s414, 128, 128, 8
        $region44: #{basic_loss.1} parent=31 // pred_fallthru
          _
        // Predicated region
        $region45: #{basic_loss.1} parent=31 // pred_check
          %p433 = pneg %p148
        $region46: #{basic_loss.1} parent=31 // pred_check_branch
          %435 = sbr.rel (%p433) target = $region48
        $region47: #{basic_loss.1} parent=31 // pred_region
          %s436 = smul.u32 2, %s38
          %p437 = scmp.lt.s32.totalorder %s37, 7
          %s438 = scalar_select %p437, %s37, 7
          %p439 = scmp.lt.s32.totalorder %s436, 1
          %s440 = scalar_select %p439, %s436, 1
          %s441 = smul.addr %s438, 2
          %s442 = sadd.s32 %s440, %s441
          %s443 = smul.addr %s442, 2
          %s444 = scalar_lea.vmem %s3, %s443
          %s445 = smul.u32 2, %s38
        $region48: #{basic_loss.1} parent=31 // pred_fallthru
          _
        // Predicated region
        $region49: #{basic_loss.1} parent=31 // pred_check
          %p446 = pneg %p176
        $region50: #{basic_loss.1} parent=31 // pred_check_branch
          %448 = sbr.rel (%p446) target = $region52
        $region51: #{basic_loss.1} parent=31 // pred_region
          %s449 = sand.u32 %s30, 1
          %s450 = scalar_lea.sflag [#allocation6], %s449
          %s451 = sand.u32 %s166, 1
          %s452 = smul.addr %s451, 4
          %s453 = scalar_lea.vmem [#allocation7], %s452
          %s454 = smul.u32 2, %s38
          %s456 = ssub.s32 64, 64
          %457 = vsyncadd %s450, %s456
          %s458 = smul.addr %s37, 2
          %s459 = sadd.s32 %s454, %s458
          %s460 = smul.addr %s459, 32
          %s461 = scalar_lea.hbm %s4, %s460
          %s462 = sshll.u32 %s453, 4
          %s463 = int_to_ptr.vmem [resolvable:$true] %s462
          %468 = dma.hbm_to_vmem [thread:$0]  %s461, 64, %s463, %s450, 32, 32, 2
        $region52: #{basic_loss.1} parent=31 // pred_fallthru
          _
      $region32: #{basic_loss.1} parent=5 // pred_fallthru
        _
      %p469 = scmp.le.s32.totalorder 1, %s30
      %p470 = scmp.lt.s32.totalorder %s30, 9
      %p471 = pnand %p469, %p470
      %p472 = pneg %p471
      // Predicated region
      $region53: #{basic_loss.1} parent=5 // pred_check
        _
      $region54: #{basic_loss.1} parent=5 // pred_check_branch
        %474 = sbr.rel (%p471) target = $region56
      $region55: #{basic_loss.1} parent=5 // pred_region
        %s475 = ssub.s32 %s30, 1
        %s476 = sand.u32 %s85, 1
        %s477 = scalar_lea.sflag [#allocation3], %s476
        %s478 = sand.u32 %s85, 1
        %s479 = smul.addr %s478, 8
        %s480 = scalar_lea.vmem [#allocation2], %s479
        // Predicated region
        $region57: #{basic_loss.1} parent=55 // pred_check
          %p481 = pneg %p98
        $region58: #{basic_loss.1} parent=55 // pred_check_branch
          %483 = sbr.rel (%p481) target = $region60
        $region59: #{basic_loss.1} parent=55 // pred_region
          %484 = dma.done %s477, 128
        $region60: #{basic_loss.1} parent=55 // pred_fallthru
          _
        %s485 = sand.u32 %s35, 1
        %s486 = scalar_lea.sflag [#allocation6], %s485
        %s487 = sand.u32 %s113, 1
        %s488 = smul.addr %s487, 16
        %s489 = scalar_lea.vmem [#allocation5], %s488
        // Predicated region
        $region61: #{basic_loss.1} parent=55 // pred_check
          %p490 = pneg %p126
        $region62: #{basic_loss.1} parent=55 // pred_check_branch
          %492 = sbr.rel (%p490) target = $region64
        $region63: #{basic_loss.1} parent=55 // pred_region
          %493 = dma.done %s486, 256
        $region64: #{basic_loss.1} parent=55 // pred_fallthru
          _
        %s494 = sand.u32 %s35, 1
        %s495 = scalar_lea.sflag [#allocation6], %s494
        %s496 = sand.u32 %s169, 1
        %s497 = smul.addr %s496, 4
        %s498 = scalar_lea.vmem [#allocation7], %s497
        // Predicated region
        $region65: #{basic_loss.1} parent=55 // pred_check
          %p499 = pneg %p182
        $region66: #{basic_loss.1} parent=55 // pred_check_branch
          %501 = sbr.rel (%p499) target = $region68
        $region67: #{basic_loss.1} parent=55 // pred_region
          %502 = dma.done %s495, 64
        $region68: #{basic_loss.1} parent=55 // pred_fallthru
          _
        %p503 = scmp.lt.s32.totalorder %s39, 7
        %s504 = scalar_select %p503, %s39, 7
        %p505 = scmp.lt.s32.totalorder %s40, 0
        %s506 = scalar_select %p505, %s40, 0
        %s507 = sadd.s32 %s506, %s504
        %s508 = smul.addr %s507, 8
        %s509 = scalar_lea.vmem %s0, %s508
        %p510 = pneg %p70
        %p511 = pneg %p67
        %s512 = sand.u32 %s85, 1
        %s513 = scalar_lea.sflag [#allocation3], %s512
        %s514 = sand.u32 %s85, 1
        %s515 = smul.addr %s514, 8
        %s516 = scalar_lea.vmem [#allocation2], %s515
        %p517 = pneg %p98
        %p518 = pneg %p95
        %s519 = sand.u32 %s35, 1
        %s520 = scalar_lea.sflag [#allocation6], %s519
        %s521 = sand.u32 %s113, 1
        %s522 = smul.addr %s521, 16
        %s523 = scalar_lea.vmem [#allocation5], %s522
        %p524 = pneg %p126
        %p525 = pneg %p123
        %s526 = smul.u32 2, %s40
        %p527 = scmp.lt.s32.totalorder %s39, 7
        %s528 = scalar_select %p527, %s39, 7
        %p529 = scmp.lt.s32.totalorder %s526, 1
        %s530 = scalar_select %p529, %s526, 1
        %s531 = smul.addr %s528, 2
        %s532 = sadd.s32 %s530, %s531
        %s533 = smul.addr %s532, 2
        %s534 = scalar_lea.vmem %s3, %s533
        %p535 = pneg %p154
        %p536 = pneg %p151
        %s537 = sand.u32 %s35, 1
        %s538 = scalar_lea.sflag [#allocation6], %s537
        %s539 = sand.u32 %s169, 1
        %s540 = smul.addr %s539, 4
        %s541 = scalar_lea.vmem [#allocation7], %s540
        %p542 = pneg %p182
        %p543 = pneg %p179
        %p544 = pneg %p203
        %p545 = pneg %p200
        %p546 = pneg %p224
        %p547 = pneg %p221
        %p548 = pneg %p245
        %p549 = pneg %p242
        %p550 = pneg %p266
        %p551 = pneg %p263
        %p552 = pneg %p294
        %p553 = pneg %p291
        %s554 = sand.u32 %s281, 1
        %s555 = scalar_lea.sflag [#allocation4], %s554
        %s556 = sand.u32 %s281, 1
        %s557 = smul.addr %s556, 8
        %s558 = scalar_lea.vmem [#allocation8], %s557
        %p559 = pneg %p322
        %p560 = pneg %p319
        %s561 = sand.u32 %s309, 1
        %s562 = scalar_lea.sflag [#allocation10], %s561
        %s563 = sand.u32 %s309, 1
        %s564 = smul.addr %s563, 8
        %s565 = scalar_lea.vmem [#allocation9], %s564
        %p566 = pneg %p350
        %p567 = pneg %p347
        %p568 = scmp.lt.s32.totalorder %s39, 7
        %s569 = scalar_select %p568, %s39, 7
        %p570 = scmp.lt.s32.totalorder %s40, 0
        %s571 = scalar_select %p570, %s40, 0
        %s572 = sadd.s32 %s571, %s569
        %s573 = scalar_lea.vmem %s11, %s572
        %p574 = scmp.lt.s32.totalorder %s39, 7
        %s575 = scalar_select %p574, %s39, 7
        %p576 = scmp.lt.s32.totalorder %s40, 0
        %s577 = scalar_select %p576, %s40, 0
        %s578 = sadd.s32 %s577, %s575
        %s579 = smul.addr %s578, 8
        %s580 = scalar_lea.vmem %s0, %s579
        %s581 = smul.u32 2, %s40
        %s582 = smul.u32 2, %s40
        %p583 = scmp.lt.s32.totalorder %s39, 7
        %s584 = scalar_select %p583, %s39, 7
        %p585 = scmp.lt.s32.totalorder %s582, 1
        %s586 = scalar_select %p585, %s582, 1
        %s587 = smul.addr %s584, 2
        %s588 = sadd.s32 %s586, %s587
        %s589 = smul.addr %s588, 2
        %s590 = scalar_lea.vmem %s3, %s589
        %s591 = smul.u32 2, %s40
        %s592 = smul.u32 2, %s40
        %p593 = scmp.lt.s32.totalorder %s39, 7
        %s594 = scalar_select %p593, %s39, 7
        %p595 = scmp.lt.s32.totalorder %s40, 0
        %s596 = scalar_select %p595, %s40, 0
        %s597 = sadd.s32 %s596, %s594
        %s598 = scalar_lea.vmem %s11, %s597
        %v599 = vld [vmem:[%s489] sm:$0xff]
        %v600 = vld [vmem:[%s489 + $0x8] sm:$0xff]
        %v601 = vld [vmem:[%s590] sm:$0x3]
        %v602 = vld [vmem:[%s590 + $0x2] sm:$0x3]
        %v603 = vunpack.c.0.s8 %v601
        %v604 = vunpack.c.0.s8 %v602
        %v605 = vcvt.s32.f32 %v603
        %v606 = vcvt.s32.f32 %v604
        %v607 = vmul.f32 %v599, %v605
        %v608 = vmul.f32 %v600, %v606
        %v609 = vld [vmem:[%s498] sm:$0x3]
        %v610 = vld [vmem:[%s498 + $0x2] sm:$0x3]
        %v611 = vunpack.c.0.s8 %v609
        %v612 = vunpack.c.0.s8 %v610
        %v613 = vcvt.s32.f32 %v611
        %v614 = vcvt.s32.f32 %v612
        %v615 = vmul.f32 %v599, %v613
        %v616 = vmul.f32 %v600, %v614
        %v617 = vld [vmem:[%s5] sm:$0xff]
        %v618 = vld [vmem:[%s6] sm:$0xff]
        %v619 = vld [vmem:[%s7] sm:$0xff]
        %v620 = vld [vmem:[%s7 + $0x8] sm:$0xff]
        %v621 = vld [vmem:[%s8] sm:$0xff]
        %v622 = vld [vmem:[%s8 + $0x8] sm:$0xff]
        %vm623 = vcmask 130048
        %v625 = vsel %vm623, %v617, 0
        %627 = vmatprep.subr.mxu0 0.0
        %628 = vmatpush1.msra.mxu0 %v607
        %629 = vmatprep.subr.mxu0 0.0
        %630 = vmatpush1.msra.mxu0 %v608
        %631 = vmatprep.subr.mxu0 0.0
        %632 = vmatpush1.msra.mxu0 0.0
        %633 = vmatprep.subr.mxu0 0.0
        %634 = vmatpush1.msra.mxu0 0.0
        %635 = vmatprep.subr.mxu0 0.0
        %636 = vmatpush1.msra.mxu0 0.0
        %637 = vmatprep.subr.mxu0 0.0
        %638 = vmatpush1.msra.mxu0 0.0
        %639 = vmatprep.subr.mxu0 0.0
        %640 = vmatpush1.msra.mxu0 0.0
        %641 = vmatprep.subr.mxu0 0.0
        %642 = vmatpush1.msra.mxu0 0.0
        %643 = vmatprep.subr.mxu0 0.0
        %644 = vmatpush1.msra.mxu0 0.0
        %645 = vmatprep.subr.mxu0 0.0
        %646 = vmatpush1.msra.mxu0 0.0
        %647 = vmatprep.subr.mxu0 0.0
        %648 = vmatpush1.msra.mxu0 0.0
        %649 = vmatprep.subr.mxu0 0.0
        %650 = vmatpush1.msra.mxu0 0.0
        %651 = vmatprep.subr.mxu0 0.0
        %652 = vmatpush1.msra.mxu0 0.0
        %653 = vmatprep.subr.mxu0 0.0
        %654 = vmatpush1.msra.mxu0 0.0
        %655 = vmatprep.subr.mxu0 0.0
        %656 = vmatpush1.msra.mxu0 0.0
        %657 = vmatprep.subr.mxu0 0.0
        %658 = vmatpush1.msra.mxu0 0.0
        %659 = vmatprep.subr.mxu0 0.0
        %660 = vmatpush1.msra.mxu0 0.0
        %661 = vmatprep.subr.mxu0 0.0
        %662 = vmatpush1.msra.mxu0 0.0
        %663 = vmatprep.subr.mxu0 0.0
        %664 = vmatpush1.msra.mxu0 0.0
        %665 = vmatprep.subr.mxu0 0.0
        %666 = vmatpush1.msra.mxu0 0.0
        %667 = vmatprep.subr.mxu0 0.0
        %668 = vmatpush1.msra.mxu0 0.0
        %669 = vmatprep.subr.mxu0 0.0
        %670 = vmatpush1.msra.mxu0 0.0
        %671 = vmatprep.subr.mxu0 0.0
        %672 = vmatpush1.msra.mxu0 0.0
        %673 = vmatprep.subr.mxu0 0.0
        %674 = vmatpush1.msra.mxu0 0.0
        %675 = vmatprep.subr.mxu0 0.0
        %676 = vmatpush1.msra.mxu0 0.0
        %677 = vmatprep.subr.mxu0 0.0
        %678 = vmatpush1.msra.mxu0 0.0
        %679 = vmatprep.subr.mxu0 0.0
        %680 = vmatpush1.msra.mxu0 0.0
        %681 = vmatprep.subr.mxu0 0.0
        %682 = vmatpush1.msra.mxu0 0.0
        %683 = vmatprep.subr.mxu0 0.0
        %684 = vmatpush1.msra.mxu0 0.0
        %685 = vmatprep.subr.mxu0 0.0
        %686 = vmatpush1.msra.mxu0 0.0
        %687 = vmatprep.subr.mxu0 0.0
        %688 = vmatpush1.msra.mxu0 0.0
        %689 = vmatprep.subr.mxu0 0.0
        %690 = vmatpush1.msra.mxu0 0.0
        %691 = vmatprep.mubr.f32.mxu0 0.0
        %692 = vmatmul.mubr.f32.gmra.mrb[0].mxu0 %v625
        %v693 = vpop.f32.mrb[0].mxu0
        %v694 = vadd.f32 0.0, %v693
        %v695 = vpop.f32.mrb[0].mxu0
        %696 = vdwg.mxu0
        %v698 = vsel %vm623, %v618, 0
        %700 = vmatprep.subr.mxu0 0.0
        %701 = vmatpush1.msra.mxu0 %v607
        %702 = vmatprep.subr.mxu0 0.0
        %703 = vmatpush1.msra.mxu0 %v608
        %704 = vmatprep.subr.mxu0 0.0
        %705 = vmatpush1.msra.mxu0 0.0
        %706 = vmatprep.subr.mxu0 0.0
        %707 = vmatpush1.msra.mxu0 0.0
        %708 = vmatprep.subr.mxu0 0.0
        %709 = vmatpush1.msra.mxu0 0.0
        %710 = vmatprep.subr.mxu0 0.0
        %711 = vmatpush1.msra.mxu0 0.0
        %712 = vmatprep.subr.mxu0 0.0
        %713 = vmatpush1.msra.mxu0 0.0
        %714 = vmatprep.subr.mxu0 0.0
        %715 = vmatpush1.msra.mxu0 0.0
        %716 = vmatprep.subr.mxu0 0.0
        %717 = vmatpush1.msra.mxu0 0.0
        %718 = vmatprep.subr.mxu0 0.0
        %719 = vmatpush1.msra.mxu0 0.0
        %720 = vmatprep.subr.mxu0 0.0
        %721 = vmatpush1.msra.mxu0 0.0
        %722 = vmatprep.subr.mxu0 0.0
        %723 = vmatpush1.msra.mxu0 0.0
        %724 = vmatprep.subr.mxu0 0.0
        %725 = vmatpush1.msra.mxu0 0.0
        %726 = vmatprep.subr.mxu0 0.0
        %727 = vmatpush1.msra.mxu0 0.0
        %728 = vmatprep.subr.mxu0 0.0
        %729 = vmatpush1.msra.mxu0 0.0
        %730 = vmatprep.subr.mxu0 0.0
        %731 = vmatpush1.msra.mxu0 0.0
        %732 = vmatprep.subr.mxu0 0.0
        %733 = vmatpush1.msra.mxu0 0.0
        %734 = vmatprep.subr.mxu0 0.0
        %735 = vmatpush1.msra.mxu0 0.0
        %736 = vmatprep.subr.mxu0 0.0
        %737 = vmatpush1.msra.mxu0 0.0
        %738 = vmatprep.subr.mxu0 0.0
        %739 = vmatpush1.msra.mxu0 0.0
        %740 = vmatprep.subr.mxu0 0.0
        %741 = vmatpush1.msra.mxu0 0.0
        %742 = vmatprep.subr.mxu0 0.0
        %743 = vmatpush1.msra.mxu0 0.0
        %744 = vmatprep.subr.mxu0 0.0
        %745 = vmatpush1.msra.mxu0 0.0
        %746 = vmatprep.subr.mxu0 0.0
        %747 = vmatpush1.msra.mxu0 0.0
        %748 = vmatprep.subr.mxu0 0.0
        %749 = vmatpush1.msra.mxu0 0.0
        %750 = vmatprep.subr.mxu0 0.0
        %751 = vmatpush1.msra.mxu0 0.0
        %752 = vmatprep.subr.mxu0 0.0
        %753 = vmatpush1.msra.mxu0 0.0
        %754 = vmatprep.subr.mxu0 0.0
        %755 = vmatpush1.msra.mxu0 0.0
        %756 = vmatprep.subr.mxu0 0.0
        %757 = vmatpush1.msra.mxu0 0.0
        %758 = vmatprep.subr.mxu0 0.0
        %759 = vmatpush1.msra.mxu0 0.0
        %760 = vmatprep.subr.mxu0 0.0
        %761 = vmatpush1.msra.mxu0 0.0
        %762 = vmatprep.subr.mxu0 0.0
        %763 = vmatpush1.msra.mxu0 0.0
        %764 = vmatprep.mubr.f32.mxu0 0.0
        %765 = vmatmul.mubr.f32.gmra.mrb[0].mxu0 %v698
        %v766 = vpop.f32.mrb[0].mxu0
        %v767 = vadd.f32 0.0, %v766
        %v768 = vpop.f32.mrb[0].mxu0
        %769 = vdwg.mxu0
        %v770 = vmax.f32 %v694, %v767
        %v772 = vsel %vm623, %v770, 0
        %774 = vmatprep.subr.mxu0 0.0
        %775 = vmatpush1.msra.mxu0 %v619
        %776 = vmatprep.subr.mxu0 0.0
        %777 = vmatpush1.msra.mxu0 %v620
        %778 = vmatprep.subr.mxu0 0.0
        %779 = vmatpush1.msra.mxu0 0.0
        %780 = vmatprep.subr.mxu0 0.0
        %781 = vmatpush1.msra.mxu0 0.0
        %782 = vmatprep.subr.mxu0 0.0
        %783 = vmatpush1.msra.mxu0 0.0
        %784 = vmatprep.subr.mxu0 0.0
        %785 = vmatpush1.msra.mxu0 0.0
        %786 = vmatprep.subr.mxu0 0.0
        %787 = vmatpush1.msra.mxu0 0.0
        %788 = vmatprep.subr.mxu0 0.0
        %789 = vmatpush1.msra.mxu0 0.0
        %790 = vmatprep.subr.mxu0 0.0
        %791 = vmatpush1.msra.mxu0 0.0
        %792 = vmatprep.subr.mxu0 0.0
        %793 = vmatpush1.msra.mxu0 0.0
        %794 = vmatprep.subr.mxu0 0.0
        %795 = vmatpush1.msra.mxu0 0.0
        %796 = vmatprep.subr.mxu0 0.0
        %797 = vmatpush1.msra.mxu0 0.0
        %798 = vmatprep.subr.mxu0 0.0
        %799 = vmatpush1.msra.mxu0 0.0
        %800 = vmatprep.subr.mxu0 0.0
        %801 = vmatpush1.msra.mxu0 0.0
        %802 = vmatprep.subr.mxu0 0.0
        %803 = vmatpush1.msra.mxu0 0.0
        %804 = vmatprep.subr.mxu0 0.0
        %805 = vmatpush1.msra.mxu0 0.0
        %806 = vmatprep.subr.mxu0 0.0
        %807 = vmatpush1.msra.mxu0 0.0
        %808 = vmatprep.subr.mxu0 0.0
        %809 = vmatpush1.msra.mxu0 0.0
        %810 = vmatprep.subr.mxu0 0.0
        %811 = vmatpush1.msra.mxu0 0.0
        %812 = vmatprep.subr.mxu0 0.0
        %813 = vmatpush1.msra.mxu0 0.0
        %814 = vmatprep.subr.mxu0 0.0
        %815 = vmatpush1.msra.mxu0 0.0
        %816 = vmatprep.subr.mxu0 0.0
        %817 = vmatpush1.msra.mxu0 0.0
        %818 = vmatprep.subr.mxu0 0.0
        %819 = vmatpush1.msra.mxu0 0.0
        %820 = vmatprep.subr.mxu0 0.0
        %821 = vmatpush1.msra.mxu0 0.0
        %822 = vmatprep.subr.mxu0 0.0
        %823 = vmatpush1.msra.mxu0 0.0
        %824 = vmatprep.subr.mxu0 0.0
        %825 = vmatpush1.msra.mxu0 0.0
        %826 = vmatprep.subr.mxu0 0.0
        %827 = vmatpush1.msra.mxu0 0.0
        %828 = vmatprep.subr.mxu0 0.0
        %829 = vmatpush1.msra.mxu0 0.0
        %830 = vmatprep.subr.mxu0 0.0
        %831 = vmatpush1.msra.mxu0 0.0
        %832 = vmatprep.subr.mxu0 0.0
        %833 = vmatpush1.msra.mxu0 0.0
        %834 = vmatprep.subr.mxu0 0.0
        %835 = vmatpush1.msra.mxu0 0.0
        %836 = vmatprep.subr.mxu0 0.0
        %837 = vmatpush1.msra.mxu0 0.0
        %838 = vmatprep.mubr.f32.mxu0 0.0
        %839 = vmatmul.mubr.f32.gmra.mrb[0].mxu0 %v772
        %v840 = vpop.f32.mrb[0].mxu0
        %v841 = vadd.f32 0.0, %v840
        %v842 = vpop.f32.mrb[0].mxu0
        %843 = vdwg.mxu0
        %844 = vmatprep.subr.mxu0 0.0
        %845 = vmatpush1.msra.mxu0 %v621
        %846 = vmatprep.subr.mxu0 0.0
        %847 = vmatpush1.msra.mxu0 %v622
        %848 = vmatprep.subr.mxu0 0.0
        %849 = vmatpush1.msra.mxu0 0.0
        %850 = vmatprep.subr.mxu0 0.0
        %851 = vmatpush1.msra.mxu0 0.0
        %852 = vmatprep.subr.mxu0 0.0
        %853 = vmatpush1.msra.mxu0 0.0
        %854 = vmatprep.subr.mxu0 0.0
        %855 = vmatpush1.msra.mxu0 0.0
        %856 = vmatprep.subr.mxu0 0.0
        %857 = vmatpush1.msra.mxu0 0.0
        %858 = vmatprep.subr.mxu0 0.0
        %859 = vmatpush1.msra.mxu0 0.0
        %860 = vmatprep.subr.mxu0 0.0
        %861 = vmatpush1.msra.mxu0 0.0
        %862 = vmatprep.subr.mxu0 0.0
        %863 = vmatpush1.msra.mxu0 0.0
        %864 = vmatprep.subr.mxu0 0.0
        %865 = vmatpush1.msra.mxu0 0.0
        %866 = vmatprep.subr.mxu0 0.0
        %867 = vmatpush1.msra.mxu0 0.0
        %868 = vmatprep.subr.mxu0 0.0
        %869 = vmatpush1.msra.mxu0 0.0
        %870 = vmatprep.subr.mxu0 0.0
        %871 = vmatpush1.msra.mxu0 0.0
        %872 = vmatprep.subr.mxu0 0.0
        %873 = vmatpush1.msra.mxu0 0.0
        %874 = vmatprep.subr.mxu0 0.0
        %875 = vmatpush1.msra.mxu0 0.0
        %876 = vmatprep.subr.mxu0 0.0
        %877 = vmatpush1.msra.mxu0 0.0
        %878 = vmatprep.subr.mxu0 0.0
        %879 = vmatpush1.msra.mxu0 0.0
        %880 = vmatprep.subr.mxu0 0.0
        %881 = vmatpush1.msra.mxu0 0.0
        %882 = vmatprep.subr.mxu0 0.0
        %883 = vmatpush1.msra.mxu0 0.0
        %884 = vmatprep.subr.mxu0 0.0
        %885 = vmatpush1.msra.mxu0 0.0
        %886 = vmatprep.subr.mxu0 0.0
        %887 = vmatpush1.msra.mxu0 0.0
        %888 = vmatprep.subr.mxu0 0.0
        %889 = vmatpush1.msra.mxu0 0.0
        %890 = vmatprep.subr.mxu0 0.0
        %891 = vmatpush1.msra.mxu0 0.0
        %892 = vmatprep.subr.mxu0 0.0
        %893 = vmatpush1.msra.mxu0 0.0
        %894 = vmatprep.subr.mxu0 0.0
        %895 = vmatpush1.msra.mxu0 0.0
        %896 = vmatprep.subr.mxu0 0.0
        %897 = vmatpush1.msra.mxu0 0.0
        %898 = vmatprep.subr.mxu0 0.0
        %899 = vmatpush1.msra.mxu0 0.0
        %900 = vmatprep.subr.mxu0 0.0
        %901 = vmatpush1.msra.mxu0 0.0
        %902 = vmatprep.subr.mxu0 0.0
        %903 = vmatpush1.msra.mxu0 0.0
        %904 = vmatprep.subr.mxu0 0.0
        %905 = vmatpush1.msra.mxu0 0.0
        %906 = vmatprep.subr.mxu0 0.0
        %907 = vmatpush1.msra.mxu0 0.0
        %908 = vmatprep.mubr.f32.mxu0 0.0
        %909 = vmatmul.mubr.f32.gmra.mrb[0].mxu0 %v772
        %v910 = vpop.f32.mrb[0].mxu0
        %v911 = vadd.f32 0.0, %v910
        %v912 = vpop.f32.mrb[0].mxu0
        %913 = vdwg.mxu0
        %v914 = vmax.f32 %v841, %v911
        %v915 = vmax.f32 %v914, 0.0
        %v916 = vmin.f32 %v915, 1.0
        %917 = vmatprep.subr.mxu0 0.0
        %918 = vmatpush1.msra.mxu0 %v615
        %919 = vmatprep.subr.mxu0 0.0
        %920 = vmatpush1.msra.mxu0 %v616
        %921 = vmatprep.subr.mxu0 0.0
        %922 = vmatpush1.msra.mxu0 0.0
        %923 = vmatprep.subr.mxu0 0.0
        %924 = vmatpush1.msra.mxu0 0.0
        %925 = vmatprep.subr.mxu0 0.0
        %926 = vmatpush1.msra.mxu0 0.0
        %927 = vmatprep.subr.mxu0 0.0
        %928 = vmatpush1.msra.mxu0 0.0
        %929 = vmatprep.subr.mxu0 0.0
        %930 = vmatpush1.msra.mxu0 0.0
        %931 = vmatprep.subr.mxu0 0.0
        %932 = vmatpush1.msra.mxu0 0.0
        %933 = vmatprep.subr.mxu0 0.0
        %934 = vmatpush1.msra.mxu0 0.0
        %935 = vmatprep.subr.mxu0 0.0
        %936 = vmatpush1.msra.mxu0 0.0
        %937 = vmatprep.subr.mxu0 0.0
        %938 = vmatpush1.msra.mxu0 0.0
        %939 = vmatprep.subr.mxu0 0.0
        %940 = vmatpush1.msra.mxu0 0.0
        %941 = vmatprep.subr.mxu0 0.0
        %942 = vmatpush1.msra.mxu0 0.0
        %943 = vmatprep.subr.mxu0 0.0
        %944 = vmatpush1.msra.mxu0 0.0
        %945 = vmatprep.subr.mxu0 0.0
        %946 = vmatpush1.msra.mxu0 0.0
        %947 = vmatprep.subr.mxu0 0.0
        %948 = vmatpush1.msra.mxu0 0.0
        %949 = vmatprep.subr.mxu0 0.0
        %950 = vmatpush1.msra.mxu0 0.0
        %951 = vmatprep.subr.mxu0 0.0
        %952 = vmatpush1.msra.mxu0 0.0
        %953 = vmatprep.subr.mxu0 0.0
        %954 = vmatpush1.msra.mxu0 0.0
        %955 = vmatprep.subr.mxu0 0.0
        %956 = vmatpush1.msra.mxu0 0.0
        %957 = vmatprep.subr.mxu0 0.0
        %958 = vmatpush1.msra.mxu0 0.0
        %959 = vmatprep.subr.mxu0 0.0
        %960 = vmatpush1.msra.mxu0 0.0
        %961 = vmatprep.subr.mxu0 0.0
        %962 = vmatpush1.msra.mxu0 0.0
        %963 = vmatprep.subr.mxu0 0.0
        %964 = vmatpush1.msra.mxu0 0.0
        %965 = vmatprep.subr.mxu0 0.0
        %966 = vmatpush1.msra.mxu0 0.0
        %967 = vmatprep.subr.mxu0 0.0
        %968 = vmatpush1.msra.mxu0 0.0
        %969 = vmatprep.subr.mxu0 0.0
        %970 = vmatpush1.msra.mxu0 0.0
        %971 = vmatprep.subr.mxu0 0.0
        %972 = vmatpush1.msra.mxu0 0.0
        %973 = vmatprep.subr.mxu0 0.0
        %974 = vmatpush1.msra.mxu0 0.0
        %975 = vmatprep.subr.mxu0 0.0
        %976 = vmatpush1.msra.mxu0 0.0
        %977 = vmatprep.subr.mxu0 0.0
        %978 = vmatpush1.msra.mxu0 0.0
        %979 = vmatprep.subr.mxu0 0.0
        %980 = vmatpush1.msra.mxu0 0.0
        %981 = vmatprep.mubr.f32.mxu0 0.0
        %982 = vmatmul.mubr.f32.gmra.mrb[0].mxu0 %v625
        %v983 = vpop.f32.mrb[0].mxu0
        %v984 = vadd.f32 0.0, %v983
        %v985 = vpop.f32.mrb[0].mxu0
        %986 = vdwg.mxu0
        %987 = vmatprep.subr.mxu0 0.0
        %988 = vmatpush1.msra.mxu0 %v615
        %989 = vmatprep.subr.mxu0 0.0
        %990 = vmatpush1.msra.mxu0 %v616
        %991 = vmatprep.subr.mxu0 0.0
        %992 = vmatpush1.msra.mxu0 0.0
        %993 = vmatprep.subr.mxu0 0.0
        %994 = vmatpush1.msra.mxu0 0.0
        %995 = vmatprep.subr.mxu0 0.0
        %996 = vmatpush1.msra.mxu0 0.0
        %997 = vmatprep.subr.mxu0 0.0
        %998 = vmatpush1.msra.mxu0 0.0
        %999 = vmatprep.subr.mxu0 0.0
        %1000 = vmatpush1.msra.mxu0 0.0
        %1001 = vmatprep.subr.mxu0 0.0
        %1002 = vmatpush1.msra.mxu0 0.0
        %1003 = vmatprep.subr.mxu0 0.0
        %1004 = vmatpush1.msra.mxu0 0.0
        %1005 = vmatprep.subr.mxu0 0.0
        %1006 = vmatpush1.msra.mxu0 0.0
        %1007 = vmatprep.subr.mxu0 0.0
        %1008 = vmatpush1.msra.mxu0 0.0
        %1009 = vmatprep.subr.mxu0 0.0
        %1010 = vmatpush1.msra.mxu0 0.0
        %1011 = vmatprep.subr.mxu0 0.0
        %1012 = vmatpush1.msra.mxu0 0.0
        %1013 = vmatprep.subr.mxu0 0.0
        %1014 = vmatpush1.msra.mxu0 0.0
        %1015 = vmatprep.subr.mxu0 0.0
        %1016 = vmatpush1.msra.mxu0 0.0
        %1017 = vmatprep.subr.mxu0 0.0
        %1018 = vmatpush1.msra.mxu0 0.0
        %1019 = vmatprep.subr.mxu0 0.0
        %1020 = vmatpush1.msra.mxu0 0.0
        %1021 = vmatprep.subr.mxu0 0.0
        %1022 = vmatpush1.msra.mxu0 0.0
        %1023 = vmatprep.subr.mxu0 0.0
        %1024 = vmatpush1.msra.mxu0 0.0
        %1025 = vmatprep.subr.mxu0 0.0
        %1026 = vmatpush1.msra.mxu0 0.0
        %1027 = vmatprep.subr.mxu0 0.0
        %1028 = vmatpush1.msra.mxu0 0.0
        %1029 = vmatprep.subr.mxu0 0.0
        %1030 = vmatpush1.msra.mxu0 0.0
        %1031 = vmatprep.subr.mxu0 0.0
        %1032 = vmatpush1.msra.mxu0 0.0
        %1033 = vmatprep.subr.mxu0 0.0
        %1034 = vmatpush1.msra.mxu0 0.0
        %1035 = vmatprep.subr.mxu0 0.0
        %1036 = vmatpush1.msra.mxu0 0.0
        %1037 = vmatprep.subr.mxu0 0.0
        %1038 = vmatpush1.msra.mxu0 0.0
        %1039 = vmatprep.subr.mxu0 0.0
        %1040 = vmatpush1.msra.mxu0 0.0
        %1041 = vmatprep.subr.mxu0 0.0
        %1042 = vmatpush1.msra.mxu0 0.0
        %1043 = vmatprep.subr.mxu0 0.0
        %1044 = vmatpush1.msra.mxu0 0.0
        %1045 = vmatprep.subr.mxu0 0.0
        %1046 = vmatpush1.msra.mxu0 0.0
        %1047 = vmatprep.subr.mxu0 0.0
        %1048 = vmatpush1.msra.mxu0 0.0
        %1049 = vmatprep.subr.mxu0 0.0
        %1050 = vmatpush1.msra.mxu0 0.0
        %1051 = vmatprep.mubr.f32.mxu0 0.0
        %1052 = vmatmul.mubr.f32.gmra.mrb[0].mxu0 %v698
        %v1053 = vpop.f32.mrb[0].mxu0
        %v1054 = vadd.f32 0.0, %v1053
        %v1055 = vpop.f32.mrb[0].mxu0
        %1056 = vdwg.mxu0
        %v1057 = vmax.f32 %v984, %v1054
        %v1059 = vsel %vm623, %v1057, 0
        %1061 = vmatprep.subr.mxu0 0.0
        %1062 = vmatpush1.msra.mxu0 %v619
        %1063 = vmatprep.subr.mxu0 0.0
        %1064 = vmatpush1.msra.mxu0 %v620
        %1065 = vmatprep.subr.mxu0 0.0
        %1066 = vmatpush1.msra.mxu0 0.0
        %1067 = vmatprep.subr.mxu0 0.0
        %1068 = vmatpush1.msra.mxu0 0.0
        %1069 = vmatprep.subr.mxu0 0.0
        %1070 = vmatpush1.msra.mxu0 0.0
        %1071 = vmatprep.subr.mxu0 0.0
        %1072 = vmatpush1.msra.mxu0 0.0
        %1073 = vmatprep.subr.mxu0 0.0
        %1074 = vmatpush1.msra.mxu0 0.0
        %1075 = vmatprep.subr.mxu0 0.0
        %1076 = vmatpush1.msra.mxu0 0.0
        %1077 = vmatprep.subr.mxu0 0.0
        %1078 = vmatpush1.msra.mxu0 0.0
        %1079 = vmatprep.subr.mxu0 0.0
        %1080 = vmatpush1.msra.mxu0 0.0
        %1081 = vmatprep.subr.mxu0 0.0
        %1082 = vmatpush1.msra.mxu0 0.0
        %1083 = vmatprep.subr.mxu0 0.0
        %1084 = vmatpush1.msra.mxu0 0.0
        %1085 = vmatprep.subr.mxu0 0.0
        %1086 = vmatpush1.msra.mxu0 0.0
        %1087 = vmatprep.subr.mxu0 0.0
        %1088 = vmatpush1.msra.mxu0 0.0
        %1089 = vmatprep.subr.mxu0 0.0
        %1090 = vmatpush1.msra.mxu0 0.0
        %1091 = vmatprep.subr.mxu0 0.0
        %1092 = vmatpush1.msra.mxu0 0.0
        %1093 = vmatprep.subr.mxu0 0.0
        %1094 = vmatpush1.msra.mxu0 0.0
        %1095 = vmatprep.subr.mxu0 0.0
        %1096 = vmatpush1.msra.mxu0 0.0
        %1097 = vmatprep.subr.mxu0 0.0
        %1098 = vmatpush1.msra.mxu0 0.0
        %1099 = vmatprep.subr.mxu0 0.0
        %1100 = vmatpush1.msra.mxu0 0.0
        %1101 = vmatprep.subr.mxu0 0.0
        %1102 = vmatpush1.msra.mxu0 0.0
        %1103 = vmatprep.subr.mxu0 0.0
        %1104 = vmatpush1.msra.mxu0 0.0
        %1105 = vmatprep.subr.mxu0 0.0
        %1106 = vmatpush1.msra.mxu0 0.0
        %1107 = vmatprep.subr.mxu0 0.0
        %1108 = vmatpush1.msra.mxu0 0.0
        %1109 = vmatprep.subr.mxu0 0.0
        %1110 = vmatpush1.msra.mxu0 0.0
        %1111 = vmatprep.subr.mxu0 0.0
        %1112 = vmatpush1.msra.mxu0 0.0
        %1113 = vmatprep.subr.mxu0 0.0
        %1114 = vmatpush1.msra.mxu0 0.0
        %1115 = vmatprep.subr.mxu0 0.0
        %1116 = vmatpush1.msra.mxu0 0.0
        %1117 = vmatprep.subr.mxu0 0.0
        %1118 = vmatpush1.msra.mxu0 0.0
        %1119 = vmatprep.subr.mxu0 0.0
        %1120 = vmatpush1.msra.mxu0 0.0
        %1121 = vmatprep.subr.mxu0 0.0
        %1122 = vmatpush1.msra.mxu0 0.0
        %1123 = vmatprep.subr.mxu0 0.0
        %1124 = vmatpush1.msra.mxu0 0.0
        %1125 = vmatprep.mubr.f32.mxu0 0.0
        %1126 = vmatmul.mubr.f32.gmra.mrb[0].mxu0 %v1059
        %v1127 = vpop.f32.mrb[0].mxu0
        %v1128 = vadd.f32 0.0, %v1127
        %v1129 = vpop.f32.mrb[0].mxu0
        %1130 = vdwg.mxu0
        %1131 = vmatprep.subr.mxu0 0.0
        %1132 = vmatpush1.msra.mxu0 %v621
        %1133 = vmatprep.subr.mxu0 0.0
        %1134 = vmatpush1.msra.mxu0 %v622
        %1135 = vmatprep.subr.mxu0 0.0
        %1136 = vmatpush1.msra.mxu0 0.0
        %1137 = vmatprep.subr.mxu0 0.0
        %1138 = vmatpush1.msra.mxu0 0.0
        %1139 = vmatprep.subr.mxu0 0.0
        %1140 = vmatpush1.msra.mxu0 0.0
        %1141 = vmatprep.subr.mxu0 0.0
        %1142 = vmatpush1.msra.mxu0 0.0
        %1143 = vmatprep.subr.mxu0 0.0
        %1144 = vmatpush1.msra.mxu0 0.0
        %1145 = vmatprep.subr.mxu0 0.0
        %1146 = vmatpush1.msra.mxu0 0.0
        %1147 = vmatprep.subr.mxu0 0.0
        %1148 = vmatpush1.msra.mxu0 0.0
        %1149 = vmatprep.subr.mxu0 0.0
        %1150 = vmatpush1.msra.mxu0 0.0
        %1151 = vmatprep.subr.mxu0 0.0
        %1152 = vmatpush1.msra.mxu0 0.0
        %1153 = vmatprep.subr.mxu0 0.0
        %1154 = vmatpush1.msra.mxu0 0.0
        %1155 = vmatprep.subr.mxu0 0.0
        %1156 = vmatpush1.msra.mxu0 0.0
        %1157 = vmatprep.subr.mxu0 0.0
        %1158 = vmatpush1.msra.mxu0 0.0
        %1159 = vmatprep.subr.mxu0 0.0
        %1160 = vmatpush1.msra.mxu0 0.0
        %1161 = vmatprep.subr.mxu0 0.0
        %1162 = vmatpush1.msra.mxu0 0.0
        %1163 = vmatprep.subr.mxu0 0.0
        %1164 = vmatpush1.msra.mxu0 0.0
        %1165 = vmatprep.subr.mxu0 0.0
        %1166 = vmatpush1.msra.mxu0 0.0
        %1167 = vmatprep.subr.mxu0 0.0
        %1168 = vmatpush1.msra.mxu0 0.0
        %1169 = vmatprep.subr.mxu0 0.0
        %1170 = vmatpush1.msra.mxu0 0.0
        %1171 = vmatprep.subr.mxu0 0.0
        %1172 = vmatpush1.msra.mxu0 0.0
        %1173 = vmatprep.subr.mxu0 0.0
        %1174 = vmatpush1.msra.mxu0 0.0
        %1175 = vmatprep.subr.mxu0 0.0
        %1176 = vmatpush1.msra.mxu0 0.0
        %1177 = vmatprep.subr.mxu0 0.0
        %1178 = vmatpush1.msra.mxu0 0.0
        %1179 = vmatprep.subr.mxu0 0.0
        %1180 = vmatpush1.msra.mxu0 0.0
        %1181 = vmatprep.subr.mxu0 0.0
        %1182 = vmatpush1.msra.mxu0 0.0
        %1183 = vmatprep.subr.mxu0 0.0
        %1184 = vmatpush1.msra.mxu0 0.0
        %1185 = vmatprep.subr.mxu0 0.0
        %1186 = vmatpush1.msra.mxu0 0.0
        %1187 = vmatprep.subr.mxu0 0.0
        %1188 = vmatpush1.msra.mxu0 0.0
        %1189 = vmatprep.subr.mxu0 0.0
        %1190 = vmatpush1.msra.mxu0 0.0
        %1191 = vmatprep.subr.mxu0 0.0
        %1192 = vmatpush1.msra.mxu0 0.0
        %1193 = vmatprep.subr.mxu0 0.0
        %1194 = vmatpush1.msra.mxu0 0.0
        %1195 = vmatprep.mubr.f32.mxu0 0.0
        %1196 = vmatmul.mubr.f32.gmra.mrb[0].mxu0 %v1059
        %v1197 = vpop.f32.mrb[0].mxu0
        %v1198 = vadd.f32 0.0, %v1197
        %v1199 = vpop.f32.mrb[0].mxu0
        %1200 = vdwg.mxu0
        %v1201 = vmax.f32 %v1128, %v1198
        %v1202 = vmax.f32 %v1201, 0.0
        %v1203 = vmin.f32 %v1202, 1.0
        %v1204 = vld [vmem:[%s580] sm:$0xff]
        %v1205 = vmax.f32 %v1204, 0.0
        %v1206 = vmin.f32 %v1205, 1.0
        %v1207 = vld [vmem:[%s480] sm:$0xff]
        %v1208 = vsub.f32 %v1206, %v1207
        %v1209 = vmul.f32 %v1208, %v1208
        %v1210 = vsub.f32 %v1208, %v916
        %v1211 = vadd.f32 %v1210, %v1203
        %v1212 = vmul.f32 %v1211, %v1211
        %vm1213 = vcmask 64512
        %1214 = vst.msk [vmem:[%s558] sm:$0xff] %vm1213, %v1209
        %1215 = vst.msk [vmem:[%s565] sm:$0xff] %vm1213, %v1212
        %v1216 = vadd.f32 %v1209, %v1212
        %v1217 = vsel %vm1213, %v1216, 0.0
        %1218 = vadd.xlane.f32.xlu0 %v1217
        %v1219 = vpop.xlane.xlu0 %1218
        %v1220 = vrot.slane %v1219, 4
        %v1221 = vadd.f32 %v1219, %v1220
        %v1222 = vrot.slane %v1221, 2
        %v1223 = vadd.f32 %v1221, %v1222
        %v1224 = vrot.slane %v1223, 1
        %v1225 = vadd.f32 %v1223, %v1224
        %s1226 = vtos %v1225
        %v1227 = vstv %s1226
        %vm1228 = vcmask 0
        %1229 = vst.msk [vmem:[%s598] sm:$0x1] %vm1228, %v1227
        %s1230 = sand.u32 %s281, 1
        %s1231 = scalar_lea.sflag [#allocation4], %s1230
        %s1232 = sand.u32 %s281, 1
        %s1233 = smul.addr %s1232, 8
        %s1234 = scalar_lea.vmem [#allocation8], %s1233
        %s1235 = sand.u32 %s309, 1
        %s1236 = scalar_lea.sflag [#allocation10], %s1235
        %s1237 = sand.u32 %s309, 1
        %s1238 = smul.addr %s1237, 8
        %s1239 = scalar_lea.vmem [#allocation9], %s1238
        %p1240 = scmp.lt.s32.totalorder %s39, 7
        %s1241 = scalar_select %p1240, %s39, 7
        %p1242 = scmp.lt.s32.totalorder %s40, 0
        %s1243 = scalar_select %p1242, %s40, 0
        %s1244 = sadd.s32 %s1243, %s1241
        %s1245 = scalar_lea.vmem %s11, %s1244
        // Predicated region
        $region69: #{basic_loss.1} parent=55 // pred_check
          %p1246 = pneg %p291
        $region70: #{basic_loss.1} parent=55 // pred_check_branch
          %1248 = sbr.rel (%p1246) target = $region72
        $region71: #{basic_loss.1} parent=55 // pred_region
          %s1250 = ssub.s32 128, 128
          %1251 = vsyncadd %s1231, %s1250
          %s1252 = sadd.s32 %s40, %s39
          %s1253 = smul.addr %s1252, 128
          %s1254 = scalar_lea.hbm %s9, %s1253
          %s1256 = sshll.u32 %s1234, 4
          %s1257 = int_to_ptr.vmem [resolvable:$true] %s1256
          %1259 = dma.vmem_to_hbm [thread:$0]  %s1257, 128, %s1254, %s1231
        $region72: #{basic_loss.1} parent=55 // pred_fallthru
          _
        // Predicated region
        $region73: #{basic_loss.1} parent=55 // pred_check
          %p1260 = pneg %p319
        $region74: #{basic_loss.1} parent=55 // pred_check_branch
          %1262 = sbr.rel (%p1260) target = $region76
        $region75: #{basic_loss.1} parent=55 // pred_region
          %s1264 = ssub.s32 128, 128
          %1265 = vsyncadd %s1236, %s1264
          %s1266 = sadd.s32 %s40, %s39
          %s1267 = smul.addr %s1266, 128
          %s1268 = scalar_lea.hbm %s10, %s1267
          %s1270 = sshll.u32 %s1239, 4
          %s1271 = int_to_ptr.vmem [resolvable:$true] %s1270
          %1273 = dma.vmem_to_hbm [thread:$0]  %s1271, 128, %s1268, %s1236
        $region76: #{basic_loss.1} parent=55 // pred_fallthru
          _
        // Predicated region
        $region77: #{basic_loss.1} parent=55 // pred_check
          %p1274 = pneg %p347
        $region78: #{basic_loss.1} parent=55 // pred_check_branch
          %1276 = sbr.rel (%p1274) target = $region80
        $region79: #{basic_loss.1} parent=55 // pred_region
          _
        $region80: #{basic_loss.1} parent=55 // pred_fallthru
          _
      $region56: #{basic_loss.1} parent=5 // pred_fallthru
        _
      %p1277 = scmp.le.s32.totalorder 2, %s30
      // Predicated region
      $region81: #{basic_loss.1} parent=5 // pred_check
        %p1278 = pneg %p1277
      $region82: #{basic_loss.1} parent=5 // pred_check_branch
        %1280 = sbr.rel (%p1278) target = $region84
      $region83: #{basic_loss.1} parent=5 // pred_region
        %s1281 = ssub.s32 %s30, 2
        // Predicated region
        $region85: #{basic_loss.1} parent=83 // pred_check
          %p1282 = pneg %p297
        $region86: #{basic_loss.1} parent=83 // pred_check_branch
          %1284 = sbr.rel (%p1282) target = $region88
        $region87: #{basic_loss.1} parent=83 // pred_region
          %s1285 = sand.u32 %s282, 1
          %s1286 = scalar_lea.sflag [#allocation4], %s1285
          %s1287 = sand.u32 %s282, 1
          %s1288 = smul.addr %s1287, 8
          %s1289 = scalar_lea.vmem [#allocation8], %s1288
          %1290 = dma.done %s1286, 128
        $region88: #{basic_loss.1} parent=83 // pred_fallthru
          _
        // Predicated region
        $region89: #{basic_loss.1} parent=83 // pred_check
          %p1291 = pneg %p325
        $region90: #{basic_loss.1} parent=83 // pred_check_branch
          %1293 = sbr.rel (%p1291) target = $region92
        $region91: #{basic_loss.1} parent=83 // pred_region
          %s1294 = sand.u32 %s310, 1
          %s1295 = scalar_lea.sflag [#allocation10], %s1294
          %s1296 = sand.u32 %s310, 1
          %s1297 = smul.addr %s1296, 8
          %s1298 = scalar_lea.vmem [#allocation9], %s1297
          %1299 = dma.done %s1295, 128
        $region92: #{basic_loss.1} parent=83 // pred_fallthru
          _
        // Predicated region
        $region93: #{basic_loss.1} parent=83 // pred_check
          %p1300 = pneg %p353
        $region94: #{basic_loss.1} parent=83 // pred_check_branch
          %1302 = sbr.rel (%p1300) target = $region96
        $region95: #{basic_loss.1} parent=83 // pred_region
          %p1303 = scmp.lt.s32.totalorder %s41, 7
          %s1304 = scalar_select %p1303, %s41, 7
          %p1305 = scmp.lt.s32.totalorder %s42, 0
          %s1306 = scalar_select %p1305, %s42, 0
          %s1307 = sadd.s32 %s1306, %s1304
          %s1308 = scalar_lea.vmem %s11, %s1307
        $region96: #{basic_loss.1} parent=83 // pred_fallthru
          _
      $region84: #{basic_loss.1} parent=5 // pred_fallthru
        _
    $region6: #{basic_loss.1} parent=1 // loop_footer
      %s34 = sadd.s32 1, %s30
    $region7: #{basic_loss.1} parent=1 // loop_footer_branch
      %29 = sbr.rel target = $region3
    $region8: #{basic_loss.1} parent=1 // loop_exit
      _
    %1309 = vsyncpa [#allocation3], 1
    %s1310 = scalar_lea.sflag [#allocation3], 1
    %1311 = vsyncpa %s1310, 1
    %1312 = vsyncpa [#allocation6], 1
    %s1313 = scalar_lea.sflag [#allocation6], 1
    %1314 = vsyncpa %s1313, 1
    %1315 = vsyncpa [#allocation4], 1
    %s1316 = scalar_lea.sflag [#allocation4], 1
    %1317 = vsyncpa %s1316, 1
    %1318 = vsyncpa [#allocation10], 1
    %s1319 = scalar_lea.sflag [#allocation10], 1
    %1320 = vsyncpa %s1319, 1

</llo_original>
